<compile_context>
chip_gen: v7x
topology: tpu7x:2x2x1
jax: 0.10.0
libtpu: 0.0.40
codegen_flags: <defaults>
</compile_context>

<pallas_src>
import functools

import jax
import jax.numpy as jnp
from jax.experimental import pallas as pl
from jax.experimental.pallas import tpu as pltpu

WIDTH = 100  # matches `width = 100` in the PyTorch script


def mlp_kernel(x_ref, w1_ref, b1_ref, w2_ref, b2_ref, w3_ref, b3_ref, o_ref):
    # Transposed layout: batch on the lane axis, features on the sublane axis.
    x = x_ref[...]                                    # (1, TM)

    # fc1: Linear(1 -> Wp) == outer product -> pure VPU broadcast multiply.
    h1 = jnp.tanh(w1_ref[...] * x + b1_ref[...])      # (Wp,1)*(1,TM) -> (Wp,TM)

    # fc2: native 128x128 MXU contraction with f32 accumulation.
    h2 = jnp.tanh(
        jnp.dot(w2_ref[...], h1, preferred_element_type=jnp.float32)
        + b2_ref[...]                                 # (Wp,1) lane-broadcast
    )                                                 # (Wp, TM)

    # fc3: Linear(Wp -> 1); result is a lane-dense (1, TM) row.
    o_ref[...] = (
        jnp.dot(w3_ref[...], h2, preferred_element_type=jnp.float32)
        + b3_ref[0, 0]                                # scalar bias from SMEM
    )


@functools.partial(jax.jit, static_argnames=("block_m",))
def net_forward(x, w1, b1, w2, b2, w3, b3, *, block_m=1024):
    n = x.shape[0]
    width = w1.shape[1]
    wp = ((width + 127) // 128) * 128                 # pad hidden width -> 128
    block_m = max(128, ((int(block_m) + 127) // 128) * 128)
    pad = wp - width

    # Transpose + zero-pad parameters into the lane/sublane-friendly layout.
    xt = x.reshape(1, n)                                     # batch on lanes
    w1c = jnp.pad(w1.reshape(width, 1), ((0, pad), (0, 0)))  # (Wp, 1)
    b1c = jnp.pad(b1.reshape(width, 1), ((0, pad), (0, 0)))  # (Wp, 1)
    w2t = jnp.pad(w2.T, ((0, pad), (0, pad)))                # (Wp, Wp) = fc2.W^T
    b2c = jnp.pad(b2.reshape(width, 1), ((0, pad), (0, 0)))  # (Wp, 1)
    w3t = jnp.pad(w3.reshape(1, width), ((0, 0), (0, pad)))  # (1, Wp) = fc3.W^T
    b3s = b3.reshape(1, 1)                                   # scalar -> SMEM

    grid = (pl.cdiv(n, block_m),)
    rep = lambda shape: pl.BlockSpec(shape, lambda i: (0, 0))  # replicated weights

    out_t = pl.pallas_call(
        mlp_kernel,
        out_shape=jax.ShapeDtypeStruct((1, n), jnp.float32),
        grid_spec=pltpu.PrefetchScalarGridSpec(
            num_scalar_prefetch=0,
            grid=grid,
            in_specs=[
                pl.BlockSpec((1, block_m), lambda i: (0, i)),       # x tile
                rep((wp, 1)),                                       # fc1 weight col
                rep((wp, 1)),                                       # fc1 bias col
                rep((wp, wp)),                                      # fc2 weight^T
                rep((wp, 1)),                                       # fc2 bias col
                rep((1, wp)),                                       # fc3 weight^T
                pl.BlockSpec(memory_space=pltpu.MemorySpace.SMEM),  # fc3 bias (scalar)
            ],
            out_specs=pl.BlockSpec((1, block_m), lambda i: (0, i)),
        ),
        compiler_params=pltpu.CompilerParams(
            dimension_semantics=("parallel",),
        ),
    )(xt, w1c, b1c, w2t, b2c, w3t, b3s)

    return out_t.reshape(n, 1)


def init_params(key, width):
    """Deterministic init mimicking PyTorch nn.Linear default:
    U(-1/sqrt(fan_in), 1/sqrt(fan_in)) for both weight and bias.
    Weights are stored (in_features, out_features) so y = x @ W + b."""
    ks = jax.random.split(key, 6)

    def uniform(k, shape, fan_in):
        bound = 1.0 / jnp.sqrt(jnp.float32(fan_in))
        return jax.random.uniform(
            k, shape, dtype=jnp.float32, minval=-bound, maxval=bound
        )

    w1 = uniform(ks[0], (1, width), 1)          # fc1.weight
    b1 = uniform(ks[1], (1, width), 1)          # fc1.bias
    w2 = uniform(ks[2], (width, width), width)  # fc2.weight
    b2 = uniform(ks[3], (1, width), width)      # fc2.bias
    w3 = uniform(ks[4], (width, 1), width)      # fc3.weight
    b3 = uniform(ks[5], (1, 1), width)          # fc3.bias
    return w1, b1, w2, b2, w3, b3


if __name__ == "__main__":
    key = jax.random.PRNGKey(0)
    k_x, k_p = jax.random.split(key)

    batch = 2048                      # 2 grid programs of block_m=1024 each
    x = jax.random.normal(k_x, (batch, 1), dtype=jnp.float32)
    params = init_params(k_p, WIDTH)

    out = net_forward(x, *params)     # default block_m=1024
    out = jax.block_until_ready(out)

    # Pure-JAX reference check of the same computation (f32 everywhere).
    w1, b1, w2, b2, w3, b3 = params
    ref = jnp.tanh(x @ w1 + b1)
    ref = jnp.tanh(ref @ w2 + b2)
    ref = ref @ w3 + b3
    assert out.shape == (batch, 1)
    assert jnp.allclose(out, ref, atol=1e-4, rtol=1e-4)

    print("KERNEL_OK")
</pallas_src>

<mosaic_0001>
module attributes {stable_mosaic.version = 11 : i64} {
  func.func @mlp_kernel(%arg0: i32, %arg1: memref<1x1024xf32, #tpu.memory_space<vmem>>, %arg2: memref<128x1xf32, #tpu.memory_space<vmem>>, %arg3: memref<128x1xf32, #tpu.memory_space<vmem>>, %arg4: memref<128x128xf32, #tpu.memory_space<vmem>>, %arg5: memref<128x1xf32, #tpu.memory_space<vmem>>, %arg6: memref<1x128xf32, #tpu.memory_space<vmem>>, %arg7: memref<1x1xf32, #tpu.memory_space<smem>>, %arg8: memref<1x1024xf32, #tpu.memory_space<vmem>>) attributes {dimension_semantics = [#tpu.dimension_semantics<parallel>], iteration_bounds = array<i64: 2>, scalar_prefetch = 0 : i64, scratch_operands = 0 : i64, tpu.core_type = #tpu.core_type<tc>, window_params = [{transform_indices = @transform_0, window_bounds = array<i64: 1, 1024>}, {pipeline_mode = #tpu.pipeline_mode<synchronous>, transform_indices = @transform_1, window_bounds = array<i64: 128, 1>}, {pipeline_mode = #tpu.pipeline_mode<synchronous>, transform_indices = @transform_2, window_bounds = array<i64: 128, 1>}, {pipeline_mode = #tpu.pipeline_mode<synchronous>, transform_indices = @transform_3, window_bounds = array<i64: 128, 128>}, {pipeline_mode = #tpu.pipeline_mode<synchronous>, transform_indices = @transform_4, window_bounds = array<i64: 128, 1>}, {pipeline_mode = #tpu.pipeline_mode<synchronous>, transform_indices = @transform_5, window_bounds = array<i64: 1, 128>}, {transform_indices = @transform_6, window_bounds = array<i64: 1, 1>}, {transform_indices = @transform_7, window_bounds = array<i64: 1, 1024>}]} {
    %c0 = arith.constant 0 : index
    %c0_0 = arith.constant 0 : index
    %0 = vector.load %arg1[%c0, %c0_0] : memref<1x1024xf32, #tpu.memory_space<vmem>>, vector<1x1024xf32>
    %c0_1 = arith.constant 0 : index
    %c0_2 = arith.constant 0 : index
    %1 = vector.load %arg2[%c0_1, %c0_2] : memref<128x1xf32, #tpu.memory_space<vmem>>, vector<128x1xf32>
    %2 = vector.broadcast %1 : vector<128x1xf32> to vector<128x1024xf32>
    %3 = vector.broadcast %0 : vector<1x1024xf32> to vector<128x1024xf32>
    %4 = arith.mulf %2, %3 : vector<128x1024xf32>
    %c0_3 = arith.constant 0 : index
    %c0_4 = arith.constant 0 : index
    %5 = vector.load %arg3[%c0_3, %c0_4] : memref<128x1xf32, #tpu.memory_space<vmem>>, vector<128x1xf32>
    %6 = vector.broadcast %5 : vector<128x1xf32> to vector<128x1024xf32>
    %7 = arith.addf %4, %6 : vector<128x1024xf32>
    %8 = math.tanh %7 : vector<128x1024xf32>
    %c0_5 = arith.constant 0 : index
    %c0_6 = arith.constant 0 : index
    %9 = vector.load %arg4[%c0_5, %c0_6] : memref<128x128xf32, #tpu.memory_space<vmem>>, vector<128x128xf32>
    %cst = arith.constant dense<0.000000e+00> : vector<128x1024xf32>
    %10 = tpu.matmul %9, %8, %cst {dimension_numbers = #tpu.dot_dimension_numbers<[1], [0], [0], [1], [0, 0, 1, 1], [], []>} : vector<128x128xf32>, vector<128x1024xf32>, vector<128x1024xf32> -> vector<128x1024xf32>
    %c0_7 = arith.constant 0 : index
    %c0_8 = arith.constant 0 : index
    %11 = vector.load %arg5[%c0_7, %c0_8] : memref<128x1xf32, #tpu.memory_space<vmem>>, vector<128x1xf32>
    %12 = vector.broadcast %11 : vector<128x1xf32> to vector<128x1024xf32>
    %13 = arith.addf %10, %12 : vector<128x1024xf32>
    %14 = math.tanh %13 : vector<128x1024xf32>
    %c0_9 = arith.constant 0 : index
    %c0_10 = arith.constant 0 : index
    %15 = vector.load %arg6[%c0_9, %c0_10] : memref<1x128xf32, #tpu.memory_space<vmem>>, vector<1x128xf32>
    %cst_11 = arith.constant dense<0.000000e+00> : vector<1x1024xf32>
    %16 = tpu.matmul %15, %14, %cst_11 {dimension_numbers = #tpu.dot_dimension_numbers<[1], [0], [0], [1], [0, 0, 1, 1], [], []>} : vector<1x128xf32>, vector<128x1024xf32>, vector<1x1024xf32> -> vector<1x1024xf32>
    %c0_12 = arith.constant 0 : index
    %c0_13 = arith.constant 0 : index
    %17 = memref.load %arg7[%c0_12, %c0_13] : memref<1x1xf32, #tpu.memory_space<smem>>
    %18 = vector.broadcast %17 : f32 to vector<1x1024xf32>
    %19 = arith.addf %16, %18 : vector<1x1024xf32>
    %c0_14 = arith.constant 0 : index
    %c0_15 = arith.constant 0 : index
    %20 = vector.load %arg8[%c0_14, %c0_15] : memref<1x1024xf32, #tpu.memory_space<vmem>>, vector<1x1024xf32>
    tpu.vector_store %arg8[%c0_14, %c0_15], %19 {strides = array<i32>} : memref<1x1024xf32, #tpu.memory_space<vmem>>, vector<1x1024xf32>,
    return
  }
  func.func @transform_0(%arg0: i32) -> (i32, i32) {
    %c0_i32 = arith.constant 0 : i32
    %c0_i32_0 = arith.constant 0 : i32
    return %c0_i32, %arg0 : i32, i32
  }
  func.func @transform_1(%arg0: i32) -> (i32, i32) {
    %c0_i32 = arith.constant 0 : i32
    %c0_i32_0 = arith.constant 0 : i32
    %c0_i32_1 = arith.constant 0 : i32
    return %c0_i32, %c0_i32_0 : i32, i32
  }
  func.func @transform_2(%arg0: i32) -> (i32, i32) {
    %c0_i32 = arith.constant 0 : i32
    %c0_i32_0 = arith.constant 0 : i32
    %c0_i32_1 = arith.constant 0 : i32
    return %c0_i32, %c0_i32_0 : i32, i32
  }
  func.func @transform_3(%arg0: i32) -> (i32, i32) {
    %c0_i32 = arith.constant 0 : i32
    %c0_i32_0 = arith.constant 0 : i32
    %c0_i32_1 = arith.constant 0 : i32
    return %c0_i32, %c0_i32_0 : i32, i32
  }
  func.func @transform_4(%arg0: i32) -> (i32, i32) {
    %c0_i32 = arith.constant 0 : i32
    %c0_i32_0 = arith.constant 0 : i32
    %c0_i32_1 = arith.constant 0 : i32
    return %c0_i32, %c0_i32_0 : i32, i32
  }
  func.func @transform_5(%arg0: i32) -> (i32, i32) {
    %c0_i32 = arith.constant 0 : i32
    %c0_i32_0 = arith.constant 0 : i32
    %c0_i32_1 = arith.constant 0 : i32
    return %c0_i32, %c0_i32_0 : i32, i32
  }
  func.func @transform_6(%arg0: i32) -> (i32, i32) {
    %c0_i32 = arith.constant 0 : i32
    %c0_i32_0 = arith.constant 0 : i32
    %c0_i32_1 = arith.constant 0 : i32
    return %c0_i32, %c0_i32_0 : i32, i32
  }
  func.func @transform_7(%arg0: i32) -> (i32, i32) {
    %c0_i32 = arith.constant 0 : i32
    %c0_i32_0 = arith.constant 0 : i32
    return %c0_i32, %arg0 : i32, i32
  }
}

</mosaic_0001>

<llo_original>
// kernel: net_forward.1
$region0: #{net_forward.1}
  #allocation0 [shape = 'u32[]', space=smem, size = 0x4, offset = 0x4, fixed_abs, tag = 'smem constant byte address 0x4 - core index']
  #allocation1 [shape = 'u32[144,128]{1,0:T(1,128)}', space=vmem, size = 0x12000, scoped, tag = 'internal scratch']
  #allocation2 [shape = 'f32[1,1]{1,0:T(1,128)S(6)}', space=smem, size = 0x200, scoped, tag = 'scoped memory for net_forward.1']
  %s0 = inlined_call_operand.vmem [shape: f32[1,2048], index: 0, kind: input, shape index: {}]
  %s1 = inlined_call_operand.vmem [shape: f32[128,1], index: 1, kind: input, shape index: {}]
  %s2 = inlined_call_operand.vmem [shape: f32[128,1], index: 2, kind: input, shape index: {}]
  %s3 = inlined_call_operand.vmem [shape: f32[128,128], index: 3, kind: input, shape index: {}]
  %s4 = inlined_call_operand.vmem [shape: f32[128,1], index: 4, kind: input, shape index: {}]
  %s5 = inlined_call_operand.vmem [shape: f32[1,128], index: 5, kind: input, shape index: {}]
  %s6 = inlined_call_operand.<no memory space> [shape: f32[1,1], index: 6, kind: input, shape index: {}]
  %s7 = inlined_call_operand.hbm [shape: f32[1,2048], index: 7, kind: output, shape index: {}]
  %s8 = sld [smem:[#allocation0]]
  $region61: #{net_forward.1} parent=0
    _
  %s10 = ssub.s32 1, %s8
  %s11 = scalar_select 0, %s10, %s8
  %12 = sst [smem:[#allocation2]] %s6
  $region1: #{net_forward.1} parent=0
    #allocation3 [shape = 'u8[8192]{0}', space=vmem, size = 0x2000, scoped, tag = 'output window, operand 0']
    #allocation4 [shape = 's32[2]{0}', space=sflag, size = 0x8, scoped, tag = 'scoped memory for net_forward.1']
    %13 = vsyncpa [#allocation4], 0
    %s14 = scalar_lea.sflag [#allocation4], 1
    %15 = vsyncpa %s14, 0
    loop: start=0, step=1, limit=4
    $region2: #{net_forward.1} parent=1 // loop_pre_header
      _
    $region3: #{net_forward.1} parent=1 // loop_header
      %s17 = sphi 0, %s21
      %p18 = scmp.ge.s32.totalorder %s17, 4
      %s27 = sphi 0, %s29
      %s30 = sphi 0, %s27
      %s31 = sphi 0, %s30
      %s47 = sphi 0, %s31
      %s51 = sphi 0, %s51
      %s53 = sphi 0, %s51
      %s54 = sphi 0, %s53
      %s68 = sphi 0, %s54
      %s72 = sphi 0, %s72
      %s74 = sphi 0, %s72
      %s75 = sphi 0, %s74
      %s89 = sphi 0, %s75
      %s93 = sphi 0, %s93
      %s95 = sphi 0, %s93
      %s96 = sphi 0, %s95
      %s110 = sphi 0, %s96
      %s114 = sphi 0, %s114
      %s116 = sphi 0, %s114
      %s117 = sphi 0, %s116
      %s131 = sphi 0, %s117
      %s135 = sphi 0, %s135
      %s137 = sphi 0, %s135
      %s138 = sphi 0, %s137
      %s152 = sphi 0, %s138
      %s156 = sphi 0, %s156
      %s158 = sphi 0, %s156
      %s159 = sphi 0, %s158
      %s173 = sphi 0, %s159
      %s179 = sphi 0, %s181
      %s182 = sphi 0, %s179
      %s183 = sphi 0, %s182
      %s199 = sphi 0, %s183
    $region4: #{net_forward.1} parent=1 // loop_header_branch
      %20 = sbr.rel (%p18) target = $region8
    $region5: #{net_forward.1} parent=1 // loop_body
      %s22 = ssub.s32 %s17, 1
      %s23 = ssub.s32 %s17, 2
      %s24 = sadd.s32 %s17, 1
      %s25 = ssub.s32 %s17, %s24
      %p26 = scmp.eq.s32.totalorder %s25, 0
      %s28 = sadd.s32 %s27, 1
      %s29 = scalar_select %p26, %s27, %s28
      %p32 = pneg %p26
      %p33 = scmp.eq.s32.totalorder %s17, 1
      %p34 = por %p32, %p33
      %p35 = scmp.ne.s32.totalorder %s27, %s30
      %p36 = scmp.eq.s32.totalorder %s17, 0
      %p37 = por %p35, %p36
      %p38 = scmp.ne.s32.totalorder %s27, %s30
      %p39 = scmp.eq.s32.totalorder %s22, 1
      %p40 = por %p38, %p39
      %p41 = scmp.ne.s32.totalorder %s30, %s31
      %p42 = scmp.eq.s32.totalorder %s22, 0
      %p43 = por %p41, %p42
      %p44 = scmp.ne.s32.totalorder %s30, %s31
      %p45 = scmp.eq.s32.totalorder %s23, 1
      %p46 = por %p44, %p45
      %p48 = scmp.ne.s32.totalorder %s31, %s47
      %p49 = scmp.eq.s32.totalorder %s23, 0
      %p50 = por %p48, %p49
      %s52 = sadd.s32 %s51, 1
      %p55 = scmp.eq.s32.totalorder %s17, 1
      %p56 = scmp.ne.s32.totalorder %s51, %s53
      %p57 = scmp.eq.s32.totalorder %s17, 0
      %p58 = por %p56, %p57
      %p59 = scmp.ne.s32.totalorder %s51, %s53
      %p60 = scmp.eq.s32.totalorder %s22, 1
      %p61 = por %p59, %p60
      %p62 = scmp.ne.s32.totalorder %s53, %s54
      %p63 = scmp.eq.s32.totalorder %s22, 0
      %p64 = por %p62, %p63
      %p65 = scmp.ne.s32.totalorder %s53, %s54
      %p66 = scmp.eq.s32.totalorder %s23, 1
      %p67 = por %p65, %p66
      %p69 = scmp.ne.s32.totalorder %s54, %s68
      %p70 = scmp.eq.s32.totalorder %s23, 0
      %p71 = por %p69, %p70
      %s73 = sadd.s32 %s72, 1
      %p76 = scmp.eq.s32.totalorder %s17, 1
      %p77 = scmp.ne.s32.totalorder %s72, %s74
      %p78 = scmp.eq.s32.totalorder %s17, 0
      %p79 = por %p77, %p78
      %p80 = scmp.ne.s32.totalorder %s72, %s74
      %p81 = scmp.eq.s32.totalorder %s22, 1
      %p82 = por %p80, %p81
      %p83 = scmp.ne.s32.totalorder %s74, %s75
      %p84 = scmp.eq.s32.totalorder %s22, 0
      %p85 = por %p83, %p84
      %p86 = scmp.ne.s32.totalorder %s74, %s75
      %p87 = scmp.eq.s32.totalorder %s23, 1
      %p88 = por %p86, %p87
      %p90 = scmp.ne.s32.totalorder %s75, %s89
      %p91 = scmp.eq.s32.totalorder %s23, 0
      %p92 = por %p90, %p91
      %s94 = sadd.s32 %s93, 1
      %p97 = scmp.eq.s32.totalorder %s17, 1
      %p98 = scmp.ne.s32.totalorder %s93, %s95
      %p99 = scmp.eq.s32.totalorder %s17, 0
      %p100 = por %p98, %p99
      %p101 = scmp.ne.s32.totalorder %s93, %s95
      %p102 = scmp.eq.s32.totalorder %s22, 1
      %p103 = por %p101, %p102
      %p104 = scmp.ne.s32.totalorder %s95, %s96
      %p105 = scmp.eq.s32.totalorder %s22, 0
      %p106 = por %p104, %p105
      %p107 = scmp.ne.s32.totalorder %s95, %s96
      %p108 = scmp.eq.s32.totalorder %s23, 1
      %p109 = por %p107, %p108
      %p111 = scmp.ne.s32.totalorder %s96, %s110
      %p112 = scmp.eq.s32.totalorder %s23, 0
      %p113 = por %p111, %p112
      %s115 = sadd.s32 %s114, 1
      %p118 = scmp.eq.s32.totalorder %s17, 1
      %p119 = scmp.ne.s32.totalorder %s114, %s116
      %p120 = scmp.eq.s32.totalorder %s17, 0
      %p121 = por %p119, %p120
      %p122 = scmp.ne.s32.totalorder %s114, %s116
      %p123 = scmp.eq.s32.totalorder %s22, 1
      %p124 = por %p122, %p123
      %p125 = scmp.ne.s32.totalorder %s116, %s117
      %p126 = scmp.eq.s32.totalorder %s22, 0
      %p127 = por %p125, %p126
      %p128 = scmp.ne.s32.totalorder %s116, %s117
      %p129 = scmp.eq.s32.totalorder %s23, 1
      %p130 = por %p128, %p129
      %p132 = scmp.ne.s32.totalorder %s117, %s131
      %p133 = scmp.eq.s32.totalorder %s23, 0
      %p134 = por %p132, %p133
      %s136 = sadd.s32 %s135, 1
      %p139 = scmp.eq.s32.totalorder %s17, 1
      %p140 = scmp.ne.s32.totalorder %s135, %s137
      %p141 = scmp.eq.s32.totalorder %s17, 0
      %p142 = por %p140, %p141
      %p143 = scmp.ne.s32.totalorder %s135, %s137
      %p144 = scmp.eq.s32.totalorder %s22, 1
      %p145 = por %p143, %p144
      %p146 = scmp.ne.s32.totalorder %s137, %s138
      %p147 = scmp.eq.s32.totalorder %s22, 0
      %p148 = por %p146, %p147
      %p149 = scmp.ne.s32.totalorder %s137, %s138
      %p150 = scmp.eq.s32.totalorder %s23, 1
      %p151 = por %p149, %p150
      %p153 = scmp.ne.s32.totalorder %s138, %s152
      %p154 = scmp.eq.s32.totalorder %s23, 0
      %p155 = por %p153, %p154
      %s157 = sadd.s32 %s156, 1
      %p160 = scmp.eq.s32.totalorder %s17, 1
      %p161 = scmp.ne.s32.totalorder %s156, %s158
      %p162 = scmp.eq.s32.totalorder %s17, 0
      %p163 = por %p161, %p162
      %p164 = scmp.ne.s32.totalorder %s156, %s158
      %p165 = scmp.eq.s32.totalorder %s22, 1
      %p166 = por %p164, %p165
      %p167 = scmp.ne.s32.totalorder %s158, %s159
      %p168 = scmp.eq.s32.totalorder %s22, 0
      %p169 = por %p167, %p168
      %p170 = scmp.ne.s32.totalorder %s158, %s159
      %p171 = scmp.eq.s32.totalorder %s23, 1
      %p172 = por %p170, %p171
      %p174 = scmp.ne.s32.totalorder %s159, %s173
      %p175 = scmp.eq.s32.totalorder %s23, 0
      %p176 = por %p174, %p175
      %s177 = ssub.s32 %s17, %s24
      %p178 = scmp.eq.s32.totalorder %s177, 0
      %s180 = sadd.s32 %s179, 1
      %s181 = scalar_select %p178, %s179, %s180
      %p184 = pneg %p178
      %p185 = scmp.eq.s32.totalorder %s17, 1
      %p186 = por %p184, %p185
      %p187 = scmp.ne.s32.totalorder %s179, %s182
      %p188 = scmp.eq.s32.totalorder %s17, 0
      %p189 = por %p187, %p188
      %p190 = scmp.ne.s32.totalorder %s179, %s182
      %p191 = scmp.eq.s32.totalorder %s22, 1
      %p192 = por %p190, %p191
      %p193 = scmp.ne.s32.totalorder %s182, %s183
      %p194 = scmp.eq.s32.totalorder %s22, 0
      %p195 = por %p193, %p194
      %p196 = scmp.ne.s32.totalorder %s182, %s183
      %p197 = scmp.eq.s32.totalorder %s23, 1
      %p198 = por %p196, %p197
      %p200 = scmp.ne.s32.totalorder %s183, %s199
      %p201 = scmp.eq.s32.totalorder %s23, 0
      %p202 = por %p200, %p201
      %p203 = scmp.le.s32.totalorder 1, %s17
      %p204 = scmp.lt.s32.totalorder %s17, 3
      %p205 = pnand %p203, %p204
      %p206 = pneg %p205
      // Predicated region
      $region9: #{net_forward.1} parent=5 // pred_check
        _
      $region10: #{net_forward.1} parent=5 // pred_check_branch
        %208 = sbr.rel (%p205) target = $region12
      $region11: #{net_forward.1} parent=5 // pred_region
        %s209 = ssub.s32 %s17, 1
        // Predicated region
        $region13: #{net_forward.1} parent=11 // pred_check
          %p210 = pneg %p64
        $region14: #{net_forward.1} parent=11 // pred_check_branch
          %212 = sbr.rel (%p210) target = $region16
        $region15: #{net_forward.1} parent=11 // pred_region
          _
        $region16: #{net_forward.1} parent=11 // pred_fallthru
          _
        // Predicated region
        $region17: #{net_forward.1} parent=11 // pred_check
          %p213 = pneg %p85
        $region18: #{net_forward.1} parent=11 // pred_check_branch
          %215 = sbr.rel (%p213) target = $region20
        $region19: #{net_forward.1} parent=11 // pred_region
          _
        $region20: #{net_forward.1} parent=11 // pred_fallthru
          _
        // Predicated region
        $region21: #{net_forward.1} parent=11 // pred_check
          %p216 = pneg %p106
        $region22: #{net_forward.1} parent=11 // pred_check_branch
          %218 = sbr.rel (%p216) target = $region24
        $region23: #{net_forward.1} parent=11 // pred_region
          _
        $region24: #{net_forward.1} parent=11 // pred_fallthru
          _
        // Predicated region
        $region25: #{net_forward.1} parent=11 // pred_check
          %p219 = pneg %p127
        $region26: #{net_forward.1} parent=11 // pred_check_branch
          %221 = sbr.rel (%p219) target = $region28
        $region27: #{net_forward.1} parent=11 // pred_region
          _
        $region28: #{net_forward.1} parent=11 // pred_fallthru
          _
        // Predicated region
        $region29: #{net_forward.1} parent=11 // pred_check
          %p222 = pneg %p148
        $region30: #{net_forward.1} parent=11 // pred_check_branch
          %224 = sbr.rel (%p222) target = $region32
        $region31: #{net_forward.1} parent=11 // pred_region
          _
        $region32: #{net_forward.1} parent=11 // pred_fallthru
          _
        // Predicated region
        $region33: #{net_forward.1} parent=11 // pred_check
          %p225 = pneg %p169
        $region34: #{net_forward.1} parent=11 // pred_check_branch
          %227 = sbr.rel (%p225) target = $region36
        $region35: #{net_forward.1} parent=11 // pred_region
          _
        $region36: #{net_forward.1} parent=11 // pred_fallthru
          _
      $region12: #{net_forward.1} parent=5 // pred_fallthru
        _
      %p228 = scmp.lt.s32.totalorder %s17, 2
      // Predicated region
      $region37: #{net_forward.1} parent=5 // pred_check
        %p229 = pneg %p228
      $region38: #{net_forward.1} parent=5 // pred_check_branch
        %231 = sbr.rel (%p229) target = $region40
      $region39: #{net_forward.1} parent=5 // pred_region
        // Predicated region
        $region41: #{net_forward.1} parent=39 // pred_check
          %p232 = pneg %p37
        $region42: #{net_forward.1} parent=39 // pred_check_branch
          %234 = sbr.rel (%p232) target = $region44
        $region43: #{net_forward.1} parent=39 // pred_region
          %s235 = smul.u32 8, %s17
          %p236 = scmp.lt.s32.totalorder %s235, 15
          %s237 = scalar_select %p236, %s235, 15
          %s238 = scalar_lea.vmem %s0, %s237
          %s239 = smul.u32 8, %s17
        $region44: #{net_forward.1} parent=39 // pred_fallthru
          _
      $region40: #{net_forward.1} parent=5 // pred_fallthru
        _
      %p240 = scmp.le.s32.totalorder 1, %s17
      %p241 = scmp.lt.s32.totalorder %s17, 3
      %p242 = pnand %p240, %p241
      %p243 = pneg %p242
      // Predicated region
      $region45: #{net_forward.1} parent=5 // pred_check
        _
      $region46: #{net_forward.1} parent=5 // pred_check_branch
        %245 = sbr.rel (%p242) target = $region48
      $region47: #{net_forward.1} parent=5 // pred_region
        %s246 = ssub.s32 %s17, 1
        %s247 = smul.u32 8, %s22
        %p248 = scmp.lt.s32.totalorder %s247, 15
        %s249 = scalar_select %p248, %s247, 15
        %s250 = scalar_lea.vmem %s0, %s249
        %p251 = pneg %p43
        %p252 = pneg %p40
        %p253 = pneg %p64
        %p254 = pneg %p61
        %p255 = pneg %p85
        %p256 = pneg %p82
        %p257 = pneg %p106
        %p258 = pneg %p103
        %p259 = pneg %p127
        %p260 = pneg %p124
        %p261 = pneg %p148
        %p262 = pneg %p145
        %p263 = pneg %p169
        %p264 = pneg %p166
        %p265 = pneg %p195
        %p266 = pneg %p192
        %s267 = sand.u32 %s182, 1
        %s268 = scalar_lea.sflag [#allocation4], %s267
        %s269 = sand.u32 %s182, 1
        %s270 = smul.addr %s269, 8
        %s271 = scalar_lea.vmem [#allocation3], %s270
        %s272 = smul.u32 8, %s22
        %p273 = scmp.lt.s32.totalorder %s272, 15
        %s274 = scalar_select %p273, %s272, 15
        %s275 = scalar_lea.vmem %s0, %s274
        %s276 = smul.u32 8, %s22
        %s277 = smul.u32 8, %s22
        %v278 = vld [vmem:[%s275] sm:$0xff]
        %v279 = vld [vmem:[%s1] sm:$0xff]
        %v280 = vld [vmem:[%s1 + $0x8] sm:$0xff]
        %v281 = vld [vmem:[%s1 + $0x10] sm:$0xff]
        %v282 = vld [vmem:[%s1 + $0x18] sm:$0xff]
        %v283 = vld [vmem:[%s1 + $0x20] sm:$0xff]
        %v284 = vld [vmem:[%s1 + $0x28] sm:$0xff]
        %v285 = vld [vmem:[%s1 + $0x30] sm:$0xff]
        %v286 = vld [vmem:[%s1 + $0x38] sm:$0xff]
        %v287 = vld [vmem:[%s1 + $0x40] sm:$0xff]
        %v288 = vld [vmem:[%s1 + $0x48] sm:$0xff]
        %v289 = vld [vmem:[%s1 + $0x50] sm:$0xff]
        %v290 = vld [vmem:[%s1 + $0x58] sm:$0xff]
        %v291 = vld [vmem:[%s1 + $0x60] sm:$0xff]
        %v292 = vld [vmem:[%s1 + $0x68] sm:$0xff]
        %v293 = vld [vmem:[%s1 + $0x70] sm:$0xff]
        %v294 = vld [vmem:[%s1 + $0x78] sm:$0xff]
        %296 = vset.pattern.permute.xlu0 0
        %297 = vperm.xlu0 %296, %v279
        %v298 = vpop.permute.xlu0 %297
        %301 = vset.pattern.permute.xlu0 0
        %302 = vperm.xlu0 %301, %v280
        %v303 = vpop.permute.xlu0 %302
        %306 = vset.pattern.permute.xlu0 0
        %307 = vperm.xlu0 %306, %v281
        %v308 = vpop.permute.xlu0 %307
        %311 = vset.pattern.permute.xlu0 0
        %312 = vperm.xlu0 %311, %v282
        %v313 = vpop.permute.xlu0 %312
        %316 = vset.pattern.permute.xlu0 0
        %317 = vperm.xlu0 %316, %v283
        %v318 = vpop.permute.xlu0 %317
        %321 = vset.pattern.permute.xlu0 0
        %322 = vperm.xlu0 %321, %v284
        %v323 = vpop.permute.xlu0 %322
        %326 = vset.pattern.permute.xlu0 0
        %327 = vperm.xlu0 %326, %v285
        %v328 = vpop.permute.xlu0 %327
        %331 = vset.pattern.permute.xlu0 0
        %332 = vperm.xlu0 %331, %v286
        %v333 = vpop.permute.xlu0 %332
        %336 = vset.pattern.permute.xlu0 0
        %337 = vperm.xlu0 %336, %v287
        %v338 = vpop.permute.xlu0 %337
        %341 = vset.pattern.permute.xlu0 0
        %342 = vperm.xlu0 %341, %v288
        %v343 = vpop.permute.xlu0 %342
        %346 = vset.pattern.permute.xlu0 0
        %347 = vperm.xlu0 %346, %v289
        %v348 = vpop.permute.xlu0 %347
        %351 = vset.pattern.permute.xlu0 0
        %352 = vperm.xlu0 %351, %v290
        %v353 = vpop.permute.xlu0 %352
        %356 = vset.pattern.permute.xlu0 0
        %357 = vperm.xlu0 %356, %v291
        %v358 = vpop.permute.xlu0 %357
        %361 = vset.pattern.permute.xlu0 0
        %362 = vperm.xlu0 %361, %v292
        %v363 = vpop.permute.xlu0 %362
        %366 = vset.pattern.permute.xlu0 0
        %367 = vperm.xlu0 %366, %v293
        %v368 = vpop.permute.xlu0 %367
        %371 = vset.pattern.permute.xlu0 0
        %372 = vperm.xlu0 %371, %v294
        %v373 = vpop.permute.xlu0 %372
        %v376 = vlaneseq
        %v377 = vshrl.u32 %v376, 7
        %v378 = vsub.s32 0, %v377
        %v379 = vrot.slane %v278, %v378
        %v380 = vlaneseq
        %v381 = vshrl.u32 %v380, 7
        %v382 = vsub.s32 1, %v381
        %v383 = vrot.slane %v278, %v382
        %v384 = vlaneseq
        %v385 = vshrl.u32 %v384, 7
        %v386 = vsub.s32 2, %v385
        %v387 = vrot.slane %v278, %v386
        %v388 = vlaneseq
        %v389 = vshrl.u32 %v388, 7
        %v390 = vsub.s32 3, %v389
        %v391 = vrot.slane %v278, %v390
        %v392 = vlaneseq
        %v393 = vshrl.u32 %v392, 7
        %v394 = vsub.s32 4, %v393
        %v395 = vrot.slane %v278, %v394
        %v396 = vlaneseq
        %v397 = vshrl.u32 %v396, 7
        %v398 = vsub.s32 5, %v397
        %v399 = vrot.slane %v278, %v398
        %v400 = vlaneseq
        %v401 = vshrl.u32 %v400, 7
        %v402 = vsub.s32 6, %v401
        %v403 = vrot.slane %v278, %v402
        %v404 = vlaneseq
        %v405 = vshrl.u32 %v404, 7
        %v406 = vsub.s32 7, %v405
        %v407 = vrot.slane %v278, %v406
        %v416 = vmul.f32 %v298, %v379
        %v417 = vmul.f32 %v298, %v383
        %v418 = vmul.f32 %v298, %v387
        %v419 = vmul.f32 %v298, %v391
        %v420 = vmul.f32 %v298, %v395
        %v421 = vmul.f32 %v298, %v399
        %v422 = vmul.f32 %v298, %v403
        %v423 = vmul.f32 %v298, %v407
        %v424 = vmul.f32 %v303, %v379
        %v425 = vmul.f32 %v303, %v383
        %v426 = vmul.f32 %v303, %v387
        %v427 = vmul.f32 %v303, %v391
        %v428 = vmul.f32 %v303, %v395
        %v429 = vmul.f32 %v303, %v399
        %v430 = vmul.f32 %v303, %v403
        %v431 = vmul.f32 %v303, %v407
        %v432 = vmul.f32 %v308, %v379
        %v433 = vmul.f32 %v308, %v383
        %v434 = vmul.f32 %v308, %v387
        %v435 = vmul.f32 %v308, %v391
        %v436 = vmul.f32 %v308, %v395
        %v437 = vmul.f32 %v308, %v399
        %v438 = vmul.f32 %v308, %v403
        %v439 = vmul.f32 %v308, %v407
        %v440 = vmul.f32 %v313, %v379
        %v441 = vmul.f32 %v313, %v383
        %v442 = vmul.f32 %v313, %v387
        %v443 = vmul.f32 %v313, %v391
        %v444 = vmul.f32 %v313, %v395
        %v445 = vmul.f32 %v313, %v399
        %v446 = vmul.f32 %v313, %v403
        %v447 = vmul.f32 %v313, %v407
        %v448 = vmul.f32 %v318, %v379
        %v449 = vmul.f32 %v318, %v383
        %v450 = vmul.f32 %v318, %v387
        %v451 = vmul.f32 %v318, %v391
        %v452 = vmul.f32 %v318, %v395
        %v453 = vmul.f32 %v318, %v399
        %v454 = vmul.f32 %v318, %v403
        %v455 = vmul.f32 %v318, %v407
        %v456 = vmul.f32 %v323, %v379
        %v457 = vmul.f32 %v323, %v383
        %v458 = vmul.f32 %v323, %v387
        %v459 = vmul.f32 %v323, %v391
        %v460 = vmul.f32 %v323, %v395
        %v461 = vmul.f32 %v323, %v399
        %v462 = vmul.f32 %v323, %v403
        %v463 = vmul.f32 %v323, %v407
        %v464 = vmul.f32 %v328, %v379
        %v465 = vmul.f32 %v328, %v383
        %v466 = vmul.f32 %v328, %v387
        %v467 = vmul.f32 %v328, %v391
        %v468 = vmul.f32 %v328, %v395
        %v469 = vmul.f32 %v328, %v399
        %v470 = vmul.f32 %v328, %v403
        %v471 = vmul.f32 %v328, %v407
        %v472 = vmul.f32 %v333, %v379
        %v473 = vmul.f32 %v333, %v383
        %v474 = vmul.f32 %v333, %v387
        %v475 = vmul.f32 %v333, %v391
        %v476 = vmul.f32 %v333, %v395
        %v477 = vmul.f32 %v333, %v399
        %v478 = vmul.f32 %v333, %v403
        %v479 = vmul.f32 %v333, %v407
        %v480 = vmul.f32 %v338, %v379
        %v481 = vmul.f32 %v338, %v383
        %v482 = vmul.f32 %v338, %v387
        %v483 = vmul.f32 %v338, %v391
        %v484 = vmul.f32 %v338, %v395
        %v485 = vmul.f32 %v338, %v399
        %v486 = vmul.f32 %v338, %v403
        %v487 = vmul.f32 %v338, %v407
        %v488 = vmul.f32 %v343, %v379
        %v489 = vmul.f32 %v343, %v383
        %v490 = vmul.f32 %v343, %v387
        %v491 = vmul.f32 %v343, %v391
        %v492 = vmul.f32 %v343, %v395
        %v493 = vmul.f32 %v343, %v399
        %v494 = vmul.f32 %v343, %v403
        %v495 = vmul.f32 %v343, %v407
        %v496 = vmul.f32 %v348, %v379
        %v497 = vmul.f32 %v348, %v383
        %v498 = vmul.f32 %v348, %v387
        %v499 = vmul.f32 %v348, %v391
        %v500 = vmul.f32 %v348, %v395
        %v501 = vmul.f32 %v348, %v399
        %v502 = vmul.f32 %v348, %v403
        %v503 = vmul.f32 %v348, %v407
        %v504 = vmul.f32 %v353, %v379
        %v505 = vmul.f32 %v353, %v383
        %v506 = vmul.f32 %v353, %v387
        %v507 = vmul.f32 %v353, %v391
        %v508 = vmul.f32 %v353, %v395
        %v509 = vmul.f32 %v353, %v399
        %v510 = vmul.f32 %v353, %v403
        %v511 = vmul.f32 %v353, %v407
        %v512 = vmul.f32 %v358, %v379
        %v513 = vmul.f32 %v358, %v383
        %v514 = vmul.f32 %v358, %v387
        %v515 = vmul.f32 %v358, %v391
        %v516 = vmul.f32 %v358, %v395
        %v517 = vmul.f32 %v358, %v399
        %v518 = vmul.f32 %v358, %v403
        %v519 = vmul.f32 %v358, %v407
        %v520 = vmul.f32 %v363, %v379
        %v521 = vmul.f32 %v363, %v383
        %v522 = vmul.f32 %v363, %v387
        %v523 = vmul.f32 %v363, %v391
        %v524 = vmul.f32 %v363, %v395
        %v525 = vmul.f32 %v363, %v399
        %v526 = vmul.f32 %v363, %v403
        %v527 = vmul.f32 %v363, %v407
        %v528 = vmul.f32 %v368, %v379
        %v529 = vmul.f32 %v368, %v383
        %v530 = vmul.f32 %v368, %v387
        %v531 = vmul.f32 %v368, %v391
        %v532 = vmul.f32 %v368, %v395
        %v533 = vmul.f32 %v368, %v399
        %v534 = vmul.f32 %v368, %v403
        %v535 = vmul.f32 %v368, %v407
        %v536 = vmul.f32 %v373, %v379
        %v537 = vmul.f32 %v373, %v383
        %v538 = vmul.f32 %v373, %v387
        %v539 = vmul.f32 %v373, %v391
        %v540 = vmul.f32 %v373, %v395
        %v541 = vmul.f32 %v373, %v399
        %v542 = vmul.f32 %v373, %v403
        %v543 = vmul.f32 %v373, %v407
        %v544 = vld [vmem:[%s2] sm:$0xff]
        %v545 = vld [vmem:[%s2 + $0x8] sm:$0xff]
        %v546 = vld [vmem:[%s2 + $0x10] sm:$0xff]
        %v547 = vld [vmem:[%s2 + $0x18] sm:$0xff]
        %v548 = vld [vmem:[%s2 + $0x20] sm:$0xff]
        %v549 = vld [vmem:[%s2 + $0x28] sm:$0xff]
        %v550 = vld [vmem:[%s2 + $0x30] sm:$0xff]
        %v551 = vld [vmem:[%s2 + $0x38] sm:$0xff]
        %v552 = vld [vmem:[%s2 + $0x40] sm:$0xff]
        %v553 = vld [vmem:[%s2 + $0x48] sm:$0xff]
        %v554 = vld [vmem:[%s2 + $0x50] sm:$0xff]
        %v555 = vld [vmem:[%s2 + $0x58] sm:$0xff]
        %v556 = vld [vmem:[%s2 + $0x60] sm:$0xff]
        %v557 = vld [vmem:[%s2 + $0x68] sm:$0xff]
        %v558 = vld [vmem:[%s2 + $0x70] sm:$0xff]
        %v559 = vld [vmem:[%s2 + $0x78] sm:$0xff]
        %561 = vset.pattern.permute.xlu0 0
        %562 = vperm.xlu0 %561, %v544
        %v563 = vpop.permute.xlu0 %562
        %566 = vset.pattern.permute.xlu0 0
        %567 = vperm.xlu0 %566, %v545
        %v568 = vpop.permute.xlu0 %567
        %571 = vset.pattern.permute.xlu0 0
        %572 = vperm.xlu0 %571, %v546
        %v573 = vpop.permute.xlu0 %572
        %576 = vset.pattern.permute.xlu0 0
        %577 = vperm.xlu0 %576, %v547
        %v578 = vpop.permute.xlu0 %577
        %581 = vset.pattern.permute.xlu0 0
        %582 = vperm.xlu0 %581, %v548
        %v583 = vpop.permute.xlu0 %582
        %586 = vset.pattern.permute.xlu0 0
        %587 = vperm.xlu0 %586, %v549
        %v588 = vpop.permute.xlu0 %587
        %591 = vset.pattern.permute.xlu0 0
        %592 = vperm.xlu0 %591, %v550
        %v593 = vpop.permute.xlu0 %592
        %596 = vset.pattern.permute.xlu0 0
        %597 = vperm.xlu0 %596, %v551
        %v598 = vpop.permute.xlu0 %597
        %601 = vset.pattern.permute.xlu0 0
        %602 = vperm.xlu0 %601, %v552
        %v603 = vpop.permute.xlu0 %602
        %606 = vset.pattern.permute.xlu0 0
        %607 = vperm.xlu0 %606, %v553
        %v608 = vpop.permute.xlu0 %607
        %611 = vset.pattern.permute.xlu0 0
        %612 = vperm.xlu0 %611, %v554
        %v613 = vpop.permute.xlu0 %612
        %616 = vset.pattern.permute.xlu0 0
        %617 = vperm.xlu0 %616, %v555
        %v618 = vpop.permute.xlu0 %617
        %621 = vset.pattern.permute.xlu0 0
        %622 = vperm.xlu0 %621, %v556
        %v623 = vpop.permute.xlu0 %622
        %626 = vset.pattern.permute.xlu0 0
        %627 = vperm.xlu0 %626, %v557
        %v628 = vpop.permute.xlu0 %627
        %631 = vset.pattern.permute.xlu0 0
        %632 = vperm.xlu0 %631, %v558
        %v633 = vpop.permute.xlu0 %632
        %636 = vset.pattern.permute.xlu0 0
        %637 = vperm.xlu0 %636, %v559
        %v638 = vpop.permute.xlu0 %637
        %v640 = vadd.f32 %v416, %v563
        %v641 = vadd.f32 %v417, %v563
        %v642 = vadd.f32 %v418, %v563
        %v643 = vadd.f32 %v419, %v563
        %v644 = vadd.f32 %v420, %v563
        %v645 = vadd.f32 %v421, %v563
        %v646 = vadd.f32 %v422, %v563
        %v647 = vadd.f32 %v423, %v563
        %v648 = vadd.f32 %v424, %v568
        %v649 = vadd.f32 %v425, %v568
        %v650 = vadd.f32 %v426, %v568
        %v651 = vadd.f32 %v427, %v568
        %v652 = vadd.f32 %v428, %v568
        %v653 = vadd.f32 %v429, %v568
        %v654 = vadd.f32 %v430, %v568
        %v655 = vadd.f32 %v431, %v568
        %v656 = vadd.f32 %v432, %v573
        %v657 = vadd.f32 %v433, %v573
        %v658 = vadd.f32 %v434, %v573
        %v659 = vadd.f32 %v435, %v573
        %v660 = vadd.f32 %v436, %v573
        %v661 = vadd.f32 %v437, %v573
        %v662 = vadd.f32 %v438, %v573
        %v663 = vadd.f32 %v439, %v573
        %v664 = vadd.f32 %v440, %v578
        %v665 = vadd.f32 %v441, %v578
        %v666 = vadd.f32 %v442, %v578
        %v667 = vadd.f32 %v443, %v578
        %v668 = vadd.f32 %v444, %v578
        %v669 = vadd.f32 %v445, %v578
        %v670 = vadd.f32 %v446, %v578
        %v671 = vadd.f32 %v447, %v578
        %v672 = vadd.f32 %v448, %v583
        %v673 = vadd.f32 %v449, %v583
        %v674 = vadd.f32 %v450, %v583
        %v675 = vadd.f32 %v451, %v583
        %v676 = vadd.f32 %v452, %v583
        %v677 = vadd.f32 %v453, %v583
        %v678 = vadd.f32 %v454, %v583
        %v679 = vadd.f32 %v455, %v583
        %v680 = vadd.f32 %v456, %v588
        %v681 = vadd.f32 %v457, %v588
        %v682 = vadd.f32 %v458, %v588
        %v683 = vadd.f32 %v459, %v588
        %v684 = vadd.f32 %v460, %v588
        %v685 = vadd.f32 %v461, %v588
        %v686 = vadd.f32 %v462, %v588
        %v687 = vadd.f32 %v463, %v588
        %v688 = vadd.f32 %v464, %v593
        %v689 = vadd.f32 %v465, %v593
        %v690 = vadd.f32 %v466, %v593
        %v691 = vadd.f32 %v467, %v593
        %v692 = vadd.f32 %v468, %v593
        %v693 = vadd.f32 %v469, %v593
        %v694 = vadd.f32 %v470, %v593
        %v695 = vadd.f32 %v471, %v593
        %v696 = vadd.f32 %v472, %v598
        %v697 = vadd.f32 %v473, %v598
        %v698 = vadd.f32 %v474, %v598
        %v699 = vadd.f32 %v475, %v598
        %v700 = vadd.f32 %v476, %v598
        %v701 = vadd.f32 %v477, %v598
        %v702 = vadd.f32 %v478, %v598
        %v703 = vadd.f32 %v479, %v598
        %v704 = vadd.f32 %v480, %v603
        %v705 = vadd.f32 %v481, %v603
        %v706 = vadd.f32 %v482, %v603
        %v707 = vadd.f32 %v483, %v603
        %v708 = vadd.f32 %v484, %v603
        %v709 = vadd.f32 %v485, %v603
        %v710 = vadd.f32 %v486, %v603
        %v711 = vadd.f32 %v487, %v603
        %v712 = vadd.f32 %v488, %v608
        %v713 = vadd.f32 %v489, %v608
        %v714 = vadd.f32 %v490, %v608
        %v715 = vadd.f32 %v491, %v608
        %v716 = vadd.f32 %v492, %v608
        %v717 = vadd.f32 %v493, %v608
        %v718 = vadd.f32 %v494, %v608
        %v719 = vadd.f32 %v495, %v608
        %v720 = vadd.f32 %v496, %v613
        %v721 = vadd.f32 %v497, %v613
        %v722 = vadd.f32 %v498, %v613
        %v723 = vadd.f32 %v499, %v613
        %v724 = vadd.f32 %v500, %v613
        %v725 = vadd.f32 %v501, %v613
        %v726 = vadd.f32 %v502, %v613
        %v727 = vadd.f32 %v503, %v613
        %v728 = vadd.f32 %v504, %v618
        %v729 = vadd.f32 %v505, %v618
        %v730 = vadd.f32 %v506, %v618
        %v731 = vadd.f32 %v507, %v618
        %v732 = vadd.f32 %v508, %v618
        %v733 = vadd.f32 %v509, %v618
        %v734 = vadd.f32 %v510, %v618
        %v735 = vadd.f32 %v511, %v618
        %v736 = vadd.f32 %v512, %v623
        %v737 = vadd.f32 %v513, %v623
        %v738 = vadd.f32 %v514, %v623
        %v739 = vadd.f32 %v515, %v623
        %v740 = vadd.f32 %v516, %v623
        %v741 = vadd.f32 %v517, %v623
        %v742 = vadd.f32 %v518, %v623
        %v743 = vadd.f32 %v519, %v623
        %v744 = vadd.f32 %v520, %v628
        %v745 = vadd.f32 %v521, %v628
        %v746 = vadd.f32 %v522, %v628
        %v747 = vadd.f32 %v523, %v628
        %v748 = vadd.f32 %v524, %v628
        %v749 = vadd.f32 %v525, %v628
        %v750 = vadd.f32 %v526, %v628
        %v751 = vadd.f32 %v527, %v628
        %v752 = vadd.f32 %v528, %v633
        %v753 = vadd.f32 %v529, %v633
        %v754 = vadd.f32 %v530, %v633
        %v755 = vadd.f32 %v531, %v633
        %v756 = vadd.f32 %v532, %v633
        %v757 = vadd.f32 %v533, %v633
        %v758 = vadd.f32 %v534, %v633
        %v759 = vadd.f32 %v535, %v633
        %v760 = vadd.f32 %v536, %v638
        %v761 = vadd.f32 %v537, %v638
        %v762 = vadd.f32 %v538, %v638
        %v763 = vadd.f32 %v539, %v638
        %v764 = vadd.f32 %v540, %v638
        %v765 = vadd.f32 %v541, %v638
        %v766 = vadd.f32 %v542, %v638
        %v767 = vadd.f32 %v543, %v638
        %v768 = vtanh.pop %v640
        %v769 = vtanh.pop %v641
        %v770 = vtanh.pop %v642
        %v771 = vtanh.pop %v643
        %v772 = vtanh.pop %v644
        %v773 = vtanh.pop %v645
        %v774 = vtanh.pop %v646
        %v775 = vtanh.pop %v647
        %v776 = vtanh.pop %v648
        %v777 = vtanh.pop %v649
        %v778 = vtanh.pop %v650
        %v779 = vtanh.pop %v651
        %v780 = vtanh.pop %v652
        %v781 = vtanh.pop %v653
        %v782 = vtanh.pop %v654
        %v783 = vtanh.pop %v655
        %v784 = vtanh.pop %v656
        %v785 = vtanh.pop %v657
        %v786 = vtanh.pop %v658
        %v787 = vtanh.pop %v659
        %v788 = vtanh.pop %v660
        %v789 = vtanh.pop %v661
        %v790 = vtanh.pop %v662
        %v791 = vtanh.pop %v663
        %v792 = vtanh.pop %v664
        %v793 = vtanh.pop %v665
        %v794 = vtanh.pop %v666
        %v795 = vtanh.pop %v667
        %v796 = vtanh.pop %v668
        %v797 = vtanh.pop %v669
        %v798 = vtanh.pop %v670
        %v799 = vtanh.pop %v671
        %v800 = vtanh.pop %v672
        %v801 = vtanh.pop %v673
        %v802 = vtanh.pop %v674
        %v803 = vtanh.pop %v675
        %v804 = vtanh.pop %v676
        %v805 = vtanh.pop %v677
        %v806 = vtanh.pop %v678
        %v807 = vtanh.pop %v679
        %v808 = vtanh.pop %v680
        %v809 = vtanh.pop %v681
        %v810 = vtanh.pop %v682
        %v811 = vtanh.pop %v683
        %v812 = vtanh.pop %v684
        %v813 = vtanh.pop %v685
        %v814 = vtanh.pop %v686
        %v815 = vtanh.pop %v687
        %v816 = vtanh.pop %v688
        %v817 = vtanh.pop %v689
        %v818 = vtanh.pop %v690
        %v819 = vtanh.pop %v691
        %v820 = vtanh.pop %v692
        %v821 = vtanh.pop %v693
        %v822 = vtanh.pop %v694
        %v823 = vtanh.pop %v695
        %v824 = vtanh.pop %v696
        %v825 = vtanh.pop %v697
        %v826 = vtanh.pop %v698
        %v827 = vtanh.pop %v699
        %v828 = vtanh.pop %v700
        %v829 = vtanh.pop %v701
        %v830 = vtanh.pop %v702
        %v831 = vtanh.pop %v703
        %v832 = vtanh.pop %v704
        %v833 = vtanh.pop %v705
        %v834 = vtanh.pop %v706
        %v835 = vtanh.pop %v707
        %v836 = vtanh.pop %v708
        %v837 = vtanh.pop %v709
        %v838 = vtanh.pop %v710
        %v839 = vtanh.pop %v711
        %v840 = vtanh.pop %v712
        %v841 = vtanh.pop %v713
        %v842 = vtanh.pop %v714
        %v843 = vtanh.pop %v715
        %v844 = vtanh.pop %v716
        %v845 = vtanh.pop %v717
        %v846 = vtanh.pop %v718
        %v847 = vtanh.pop %v719
        %v848 = vtanh.pop %v720
        %v849 = vtanh.pop %v721
        %v850 = vtanh.pop %v722
        %v851 = vtanh.pop %v723
        %v852 = vtanh.pop %v724
        %v853 = vtanh.pop %v725
        %v854 = vtanh.pop %v726
        %v855 = vtanh.pop %v727
        %v856 = vtanh.pop %v728
        %v857 = vtanh.pop %v729
        %v858 = vtanh.pop %v730
        %v859 = vtanh.pop %v731
        %v860 = vtanh.pop %v732
        %v861 = vtanh.pop %v733
        %v862 = vtanh.pop %v734
        %v863 = vtanh.pop %v735
        %v864 = vtanh.pop %v736
        %v865 = vtanh.pop %v737
        %v866 = vtanh.pop %v738
        %v867 = vtanh.pop %v739
        %v868 = vtanh.pop %v740
        %v869 = vtanh.pop %v741
        %v870 = vtanh.pop %v742
        %v871 = vtanh.pop %v743
        %v872 = vtanh.pop %v744
        %v873 = vtanh.pop %v745
        %v874 = vtanh.pop %v746
        %v875 = vtanh.pop %v747
        %v876 = vtanh.pop %v748
        %v877 = vtanh.pop %v749
        %v878 = vtanh.pop %v750
        %v879 = vtanh.pop %v751
        %v880 = vtanh.pop %v752
        %v881 = vtanh.pop %v753
        %v882 = vtanh.pop %v754
        %v883 = vtanh.pop %v755
        %v884 = vtanh.pop %v756
        %v885 = vtanh.pop %v757
        %v886 = vtanh.pop %v758
        %v887 = vtanh.pop %v759
        %v888 = vtanh.pop %v760
        %v889 = vtanh.pop %v761
        %v890 = vtanh.pop %v762
        %v891 = vtanh.pop %v763
        %v892 = vtanh.pop %v764
        %v893 = vtanh.pop %v765
        %v894 = vtanh.pop %v766
        %v895 = vtanh.pop %v767
        %v896 = vld [vmem:[%s3] sm:$0xff]
        %v897 = vld [vmem:[%s3 + $0x8] sm:$0xff]
        %v898 = vld [vmem:[%s3 + $0x10] sm:$0xff]
        %v899 = vld [vmem:[%s3 + $0x18] sm:$0xff]
        %v900 = vld [vmem:[%s3 + $0x20] sm:$0xff]
        %v901 = vld [vmem:[%s3 + $0x28] sm:$0xff]
        %v902 = vld [vmem:[%s3 + $0x30] sm:$0xff]
        %v903 = vld [vmem:[%s3 + $0x38] sm:$0xff]
        %v904 = vld [vmem:[%s3 + $0x40] sm:$0xff]
        %v905 = vld [vmem:[%s3 + $0x48] sm:$0xff]
        %v906 = vld [vmem:[%s3 + $0x50] sm:$0xff]
        %v907 = vld [vmem:[%s3 + $0x58] sm:$0xff]
        %v908 = vld [vmem:[%s3 + $0x60] sm:$0xff]
        %v909 = vld [vmem:[%s3 + $0x68] sm:$0xff]
        %v910 = vld [vmem:[%s3 + $0x70] sm:$0xff]
        %v911 = vld [vmem:[%s3 + $0x78] sm:$0xff]
        %v912 = vld [vmem:[%s4] sm:$0xff]
        %v913 = vld [vmem:[%s4 + $0x8] sm:$0xff]
        %v914 = vld [vmem:[%s4 + $0x10] sm:$0xff]
        %v915 = vld [vmem:[%s4 + $0x18] sm:$0xff]
        %v916 = vld [vmem:[%s4 + $0x20] sm:$0xff]
        %v917 = vld [vmem:[%s4 + $0x28] sm:$0xff]
        %v918 = vld [vmem:[%s4 + $0x30] sm:$0xff]
        %v919 = vld [vmem:[%s4 + $0x38] sm:$0xff]
        %v920 = vld [vmem:[%s4 + $0x40] sm:$0xff]
        %v921 = vld [vmem:[%s4 + $0x48] sm:$0xff]
        %v922 = vld [vmem:[%s4 + $0x50] sm:$0xff]
        %v923 = vld [vmem:[%s4 + $0x58] sm:$0xff]
        %v924 = vld [vmem:[%s4 + $0x60] sm:$0xff]
        %v925 = vld [vmem:[%s4 + $0x68] sm:$0xff]
        %v926 = vld [vmem:[%s4 + $0x70] sm:$0xff]
        %v927 = vld [vmem:[%s4 + $0x78] sm:$0xff]
        %929 = vset.pattern.permute.xlu0 0
        %930 = vperm.xlu0 %929, %v912
        %v931 = vpop.permute.xlu0 %930
        %934 = vset.pattern.permute.xlu0 0
        %935 = vperm.xlu0 %934, %v913
        %v936 = vpop.permute.xlu0 %935
        %939 = vset.pattern.permute.xlu0 0
        %940 = vperm.xlu0 %939, %v914
        %v941 = vpop.permute.xlu0 %940
        %944 = vset.pattern.permute.xlu0 0
        %945 = vperm.xlu0 %944, %v915
        %v946 = vpop.permute.xlu0 %945
        %949 = vset.pattern.permute.xlu0 0
        %950 = vperm.xlu0 %949, %v916
        %v951 = vpop.permute.xlu0 %950
        %954 = vset.pattern.permute.xlu0 0
        %955 = vperm.xlu0 %954, %v917
        %v956 = vpop.permute.xlu0 %955
        %959 = vset.pattern.permute.xlu0 0
        %960 = vperm.xlu0 %959, %v918
        %v961 = vpop.permute.xlu0 %960
        %964 = vset.pattern.permute.xlu0 0
        %965 = vperm.xlu0 %964, %v919
        %v966 = vpop.permute.xlu0 %965
        %969 = vset.pattern.permute.xlu0 0
        %970 = vperm.xlu0 %969, %v920
        %v971 = vpop.permute.xlu0 %970
        %974 = vset.pattern.permute.xlu0 0
        %975 = vperm.xlu0 %974, %v921
        %v976 = vpop.permute.xlu0 %975
        %979 = vset.pattern.permute.xlu0 0
        %980 = vperm.xlu0 %979, %v922
        %v981 = vpop.permute.xlu0 %980
        %984 = vset.pattern.permute.xlu0 0
        %985 = vperm.xlu0 %984, %v923
        %v986 = vpop.permute.xlu0 %985
        %989 = vset.pattern.permute.xlu0 0
        %990 = vperm.xlu0 %989, %v924
        %v991 = vpop.permute.xlu0 %990
        %994 = vset.pattern.permute.xlu0 0
        %995 = vperm.xlu0 %994, %v925
        %v996 = vpop.permute.xlu0 %995
        %999 = vset.pattern.permute.xlu0 0
        %1000 = vperm.xlu0 %999, %v926
        %v1001 = vpop.permute.xlu0 %1000
        %1004 = vset.pattern.permute.xlu0 0
        %1005 = vperm.xlu0 %1004, %v927
        %v1006 = vpop.permute.xlu0 %1005
        %1008 = vmatprep.subr.mxu0 %v769
        %1009 = vmatpush1.msra.mxu0 %v768
        %1010 = vmatprep.subr.mxu0 %v777
        %1011 = vmatpush1.msra.mxu0 %v776
        %1012 = vmatprep.subr.mxu0 %v785
        %1013 = vmatpush1.msra.mxu0 %v784
        %1014 = vmatprep.subr.mxu0 %v793
        %1015 = vmatpush1.msra.mxu0 %v792
        %1016 = vmatprep.subr.mxu0 %v801
        %1017 = vmatpush1.msra.mxu0 %v800
        %1018 = vmatprep.subr.mxu0 %v809
        %1019 = vmatpush1.msra.mxu0 %v808
        %1020 = vmatprep.subr.mxu0 %v817
        %1021 = vmatpush1.msra.mxu0 %v816
        %1022 = vmatprep.subr.mxu0 %v825
        %1023 = vmatpush1.msra.mxu0 %v824
        %1024 = vmatprep.subr.mxu0 %v833
        %1025 = vmatpush1.msra.mxu0 %v832
        %1026 = vmatprep.subr.mxu0 %v841
        %1027 = vmatpush1.msra.mxu0 %v840
        %1028 = vmatprep.subr.mxu0 %v849
        %1029 = vmatpush1.msra.mxu0 %v848
        %1030 = vmatprep.subr.mxu0 %v857
        %1031 = vmatpush1.msra.mxu0 %v856
        %1032 = vmatprep.subr.mxu0 %v865
        %1033 = vmatpush1.msra.mxu0 %v864
        %1034 = vmatprep.subr.mxu0 %v873
        %1035 = vmatpush1.msra.mxu0 %v872
        %1036 = vmatprep.subr.mxu0 %v881
        %1037 = vmatpush1.msra.mxu0 %v880
        %1038 = vmatprep.subr.mxu0 %v889
        %1039 = vmatpush1.msra.mxu0 %v888
        %1040 = vmatprep.subr.mxu0 0.0
        %1041 = vmatpush1.msra.mxu0 0.0
        %1042 = vmatprep.subr.mxu0 0.0
        %1043 = vmatpush1.msra.mxu0 0.0
        %1044 = vmatprep.subr.mxu0 0.0
        %1045 = vmatpush1.msra.mxu0 0.0
        %1046 = vmatprep.subr.mxu0 0.0
        %1047 = vmatpush1.msra.mxu0 0.0
        %1048 = vmatprep.subr.mxu0 0.0
        %1049 = vmatpush1.msra.mxu0 0.0
        %1050 = vmatprep.subr.mxu0 0.0
        %1051 = vmatpush1.msra.mxu0 0.0
        %1052 = vmatprep.subr.mxu0 0.0
        %1053 = vmatpush1.msra.mxu0 0.0
        %1054 = vmatprep.subr.mxu0 0.0
        %1055 = vmatpush1.msra.mxu0 0.0
        %1056 = vmatprep.subr.mxu0 0.0
        %1057 = vmatpush1.msra.mxu0 0.0
        %1058 = vmatprep.subr.mxu0 0.0
        %1059 = vmatpush1.msra.mxu0 0.0
        %1060 = vmatprep.subr.mxu0 0.0
        %1061 = vmatpush1.msra.mxu0 0.0
        %1062 = vmatprep.subr.mxu0 0.0
        %1063 = vmatpush1.msra.mxu0 0.0
        %1064 = vmatprep.subr.mxu0 0.0
        %1065 = vmatpush1.msra.mxu0 0.0
        %1066 = vmatprep.subr.mxu0 0.0
        %1067 = vmatpush1.msra.mxu0 0.0
        %1068 = vmatprep.subr.mxu0 0.0
        %1069 = vmatpush1.msra.mxu0 0.0
        %1070 = vmatprep.subr.mxu0 0.0
        %1071 = vmatpush1.msra.mxu0 0.0
        %1072 = vmatprep.mubr.f32.mxu0 0.0
        %1073 = vmatmul.mubr.f32.gmra.mrb[0].mxu0 %v896
        %v1074 = vpop.f32.mrb[0].mxu0
        %v1075 = vadd.f32 %v931, %v1074
        %v1076 = vpop.f32.mrb[0].mxu0
        %v1077 = vadd.f32 %v931, %v1076
        %1078 = vmatprep.mubr.f32.mxu0 0.0
        %1079 = vmatmul.mubr.f32.gmra.mrb[0].mxu0 %v897
        %v1080 = vpop.f32.mrb[0].mxu0
        %v1081 = vadd.f32 %v936, %v1080
        %v1082 = vpop.f32.mrb[0].mxu0
        %v1083 = vadd.f32 %v936, %v1082
        %1084 = vmatprep.mubr.f32.mxu0 0.0
        %1085 = vmatmul.mubr.f32.gmra.mrb[0].mxu0 %v898
        %v1086 = vpop.f32.mrb[0].mxu0
        %v1087 = vadd.f32 %v941, %v1086
        %v1088 = vpop.f32.mrb[0].mxu0
        %v1089 = vadd.f32 %v941, %v1088
        %1090 = vmatprep.mubr.f32.mxu0 0.0
        %1091 = vmatmul.mubr.f32.gmra.mrb[0].mxu0 %v899
        %v1092 = vpop.f32.mrb[0].mxu0
        %v1093 = vadd.f32 %v946, %v1092
        %v1094 = vpop.f32.mrb[0].mxu0
        %v1095 = vadd.f32 %v946, %v1094
        %1096 = vmatprep.mubr.f32.mxu0 0.0
        %1097 = vmatmul.mubr.f32.gmra.mrb[0].mxu0 %v900
        %v1098 = vpop.f32.mrb[0].mxu0
        %v1099 = vadd.f32 %v951, %v1098
        %v1100 = vpop.f32.mrb[0].mxu0
        %v1101 = vadd.f32 %v951, %v1100
        %1102 = vmatprep.mubr.f32.mxu0 0.0
        %1103 = vmatmul.mubr.f32.gmra.mrb[0].mxu0 %v901
        %v1104 = vpop.f32.mrb[0].mxu0
        %v1105 = vadd.f32 %v956, %v1104
        %v1106 = vpop.f32.mrb[0].mxu0
        %v1107 = vadd.f32 %v956, %v1106
        %1108 = vmatprep.mubr.f32.mxu0 0.0
        %1109 = vmatmul.mubr.f32.gmra.mrb[0].mxu0 %v902
        %v1110 = vpop.f32.mrb[0].mxu0
        %v1111 = vadd.f32 %v961, %v1110
        %v1112 = vpop.f32.mrb[0].mxu0
        %v1113 = vadd.f32 %v961, %v1112
        %1114 = vmatprep.mubr.f32.mxu0 0.0
        %1115 = vmatmul.mubr.f32.gmra.mrb[0].mxu0 %v903
        %v1116 = vpop.f32.mrb[0].mxu0
        %v1117 = vadd.f32 %v966, %v1116
        %v1118 = vpop.f32.mrb[0].mxu0
        %v1119 = vadd.f32 %v966, %v1118
        %1120 = vmatprep.mubr.f32.mxu0 0.0
        %1121 = vmatmul.mubr.f32.gmra.mrb[0].mxu0 %v904
        %v1122 = vpop.f32.mrb[0].mxu0
        %v1123 = vadd.f32 %v971, %v1122
        %v1124 = vpop.f32.mrb[0].mxu0
        %v1125 = vadd.f32 %v971, %v1124
        %1126 = vmatprep.mubr.f32.mxu0 0.0
        %1127 = vmatmul.mubr.f32.gmra.mrb[0].mxu0 %v905
        %v1128 = vpop.f32.mrb[0].mxu0
        %v1129 = vadd.f32 %v976, %v1128
        %v1130 = vpop.f32.mrb[0].mxu0
        %v1131 = vadd.f32 %v976, %v1130
        %1132 = vmatprep.mubr.f32.mxu0 0.0
        %1133 = vmatmul.mubr.f32.gmra.mrb[0].mxu0 %v906
        %v1134 = vpop.f32.mrb[0].mxu0
        %v1135 = vadd.f32 %v981, %v1134
        %v1136 = vpop.f32.mrb[0].mxu0
        %v1137 = vadd.f32 %v981, %v1136
        %1138 = vmatprep.mubr.f32.mxu0 0.0
        %1139 = vmatmul.mubr.f32.gmra.mrb[0].mxu0 %v907
        %v1140 = vpop.f32.mrb[0].mxu0
        %v1141 = vadd.f32 %v986, %v1140
        %v1142 = vpop.f32.mrb[0].mxu0
        %v1143 = vadd.f32 %v986, %v1142
        %1144 = vmatprep.mubr.f32.mxu0 0.0
        %1145 = vmatmul.mubr.f32.gmra.mrb[0].mxu0 %v908
        %v1146 = vpop.f32.mrb[0].mxu0
        %v1147 = vadd.f32 %v991, %v1146
        %v1148 = vpop.f32.mrb[0].mxu0
        %v1149 = vadd.f32 %v991, %v1148
        %1150 = vmatprep.mubr.f32.mxu0 0.0
        %1151 = vmatmul.mubr.f32.gmra.mrb[0].mxu0 %v909
        %v1152 = vpop.f32.mrb[0].mxu0
        %v1153 = vadd.f32 %v996, %v1152
        %v1154 = vpop.f32.mrb[0].mxu0
        %v1155 = vadd.f32 %v996, %v1154
        %1156 = vmatprep.mubr.f32.mxu0 0.0
        %1157 = vmatmul.mubr.f32.gmra.mrb[0].mxu0 %v910
        %v1158 = vpop.f32.mrb[0].mxu0
        %v1159 = vadd.f32 %v1001, %v1158
        %v1160 = vpop.f32.mrb[0].mxu0
        %v1161 = vadd.f32 %v1001, %v1160
        %1162 = vmatprep.mubr.f32.mxu0 0.0
        %1163 = vmatmul.mubr.f32.gmra.mrb[0].mxu0 %v911
        %v1164 = vpop.f32.mrb[0].mxu0
        %v1165 = vadd.f32 %v1006, %v1164
        %v1166 = vpop.f32.mrb[0].mxu0
        %v1167 = vadd.f32 %v1006, %v1166
        %1168 = vdwg.mxu0
        %1169 = vmatprep.subr.mxu0 %v771
        %1170 = vmatpush1.msra.mxu0 %v770
        %1171 = vmatprep.subr.mxu0 %v779
        %1172 = vmatpush1.msra.mxu0 %v778
        %1173 = vmatprep.subr.mxu0 %v787
        %1174 = vmatpush1.msra.mxu0 %v786
        %1175 = vmatprep.subr.mxu0 %v795
        %1176 = vmatpush1.msra.mxu0 %v794
        %1177 = vmatprep.subr.mxu0 %v803
        %1178 = vmatpush1.msra.mxu0 %v802
        %1179 = vmatprep.subr.mxu0 %v811
        %1180 = vmatpush1.msra.mxu0 %v810
        %1181 = vmatprep.subr.mxu0 %v819
        %1182 = vmatpush1.msra.mxu0 %v818
        %1183 = vmatprep.subr.mxu0 %v827
        %1184 = vmatpush1.msra.mxu0 %v826
        %1185 = vmatprep.subr.mxu0 %v835
        %1186 = vmatpush1.msra.mxu0 %v834
        %1187 = vmatprep.subr.mxu0 %v843
        %1188 = vmatpush1.msra.mxu0 %v842
        %1189 = vmatprep.subr.mxu0 %v851
        %1190 = vmatpush1.msra.mxu0 %v850
        %1191 = vmatprep.subr.mxu0 %v859
        %1192 = vmatpush1.msra.mxu0 %v858
        %1193 = vmatprep.subr.mxu0 %v867
        %1194 = vmatpush1.msra.mxu0 %v866
        %1195 = vmatprep.subr.mxu0 %v875
        %1196 = vmatpush1.msra.mxu0 %v874
        %1197 = vmatprep.subr.mxu0 %v883
        %1198 = vmatpush1.msra.mxu0 %v882
        %1199 = vmatprep.subr.mxu0 %v891
        %1200 = vmatpush1.msra.mxu0 %v890
        %1201 = vmatprep.subr.mxu0 0.0
        %1202 = vmatpush1.msra.mxu0 0.0
        %1203 = vmatprep.subr.mxu0 0.0
        %1204 = vmatpush1.msra.mxu0 0.0
        %1205 = vmatprep.subr.mxu0 0.0
        %1206 = vmatpush1.msra.mxu0 0.0
        %1207 = vmatprep.subr.mxu0 0.0
        %1208 = vmatpush1.msra.mxu0 0.0
        %1209 = vmatprep.subr.mxu0 0.0
        %1210 = vmatpush1.msra.mxu0 0.0
        %1211 = vmatprep.subr.mxu0 0.0
        %1212 = vmatpush1.msra.mxu0 0.0
        %1213 = vmatprep.subr.mxu0 0.0
        %1214 = vmatpush1.msra.mxu0 0.0
        %1215 = vmatprep.subr.mxu0 0.0
        %1216 = vmatpush1.msra.mxu0 0.0
        %1217 = vmatprep.subr.mxu0 0.0
        %1218 = vmatpush1.msra.mxu0 0.0
        %1219 = vmatprep.subr.mxu0 0.0
        %1220 = vmatpush1.msra.mxu0 0.0
        %1221 = vmatprep.subr.mxu0 0.0
        %1222 = vmatpush1.msra.mxu0 0.0
        %1223 = vmatprep.subr.mxu0 0.0
        %1224 = vmatpush1.msra.mxu0 0.0
        %1225 = vmatprep.subr.mxu0 0.0
        %1226 = vmatpush1.msra.mxu0 0.0
        %1227 = vmatprep.subr.mxu0 0.0
        %1228 = vmatpush1.msra.mxu0 0.0
        %1229 = vmatprep.subr.mxu0 0.0
        %1230 = vmatpush1.msra.mxu0 0.0
        %1231 = vmatprep.subr.mxu0 0.0
        %1232 = vmatpush1.msra.mxu0 0.0
        %1233 = vmatprep.mubr.f32.mxu0 0.0
        %1234 = vmatmul.mubr.f32.gmra.mrb[0].mxu0 %v896
        %v1235 = vpop.f32.mrb[0].mxu0
        %v1236 = vadd.f32 %v931, %v1235
        %v1237 = vpop.f32.mrb[0].mxu0
        %v1238 = vadd.f32 %v931, %v1237
        %1239 = vmatprep.mubr.f32.mxu0 0.0
        %1240 = vmatmul.mubr.f32.gmra.mrb[0].mxu0 %v897
        %v1241 = vpop.f32.mrb[0].mxu0
        %v1242 = vadd.f32 %v936, %v1241
        %v1243 = vpop.f32.mrb[0].mxu0
        %v1244 = vadd.f32 %v936, %v1243
        %1245 = vmatprep.mubr.f32.mxu0 0.0
        %1246 = vmatmul.mubr.f32.gmra.mrb[0].mxu0 %v898
        %v1247 = vpop.f32.mrb[0].mxu0
        %v1248 = vadd.f32 %v941, %v1247
        %v1249 = vpop.f32.mrb[0].mxu0
        %v1250 = vadd.f32 %v941, %v1249
        %1251 = vmatprep.mubr.f32.mxu0 0.0
        %1252 = vmatmul.mubr.f32.gmra.mrb[0].mxu0 %v899
        %v1253 = vpop.f32.mrb[0].mxu0
        %v1254 = vadd.f32 %v946, %v1253
        %v1255 = vpop.f32.mrb[0].mxu0
        %v1256 = vadd.f32 %v946, %v1255
        %1257 = vmatprep.mubr.f32.mxu0 0.0
        %1258 = vmatmul.mubr.f32.gmra.mrb[0].mxu0 %v900
        %v1259 = vpop.f32.mrb[0].mxu0
        %v1260 = vadd.f32 %v951, %v1259
        %v1261 = vpop.f32.mrb[0].mxu0
        %v1262 = vadd.f32 %v951, %v1261
        %1263 = vmatprep.mubr.f32.mxu0 0.0
        %1264 = vmatmul.mubr.f32.gmra.mrb[0].mxu0 %v901
        %v1265 = vpop.f32.mrb[0].mxu0
        %v1266 = vadd.f32 %v956, %v1265
        %v1267 = vpop.f32.mrb[0].mxu0
        %v1268 = vadd.f32 %v956, %v1267
        %1269 = vmatprep.mubr.f32.mxu0 0.0
        %1270 = vmatmul.mubr.f32.gmra.mrb[0].mxu0 %v902
        %v1271 = vpop.f32.mrb[0].mxu0
        %v1272 = vadd.f32 %v961, %v1271
        %v1273 = vpop.f32.mrb[0].mxu0
        %v1274 = vadd.f32 %v961, %v1273
        %1275 = vmatprep.mubr.f32.mxu0 0.0
        %1276 = vmatmul.mubr.f32.gmra.mrb[0].mxu0 %v903
        %v1277 = vpop.f32.mrb[0].mxu0
        %v1278 = vadd.f32 %v966, %v1277
        %v1279 = vpop.f32.mrb[0].mxu0
        %v1280 = vadd.f32 %v966, %v1279
        %1281 = vmatprep.mubr.f32.mxu0 0.0
        %1282 = vmatmul.mubr.f32.gmra.mrb[0].mxu0 %v904
        %v1283 = vpop.f32.mrb[0].mxu0
        %v1284 = vadd.f32 %v971, %v1283
        %v1285 = vpop.f32.mrb[0].mxu0
        %v1286 = vadd.f32 %v971, %v1285
        %1287 = vmatprep.mubr.f32.mxu0 0.0
        %1288 = vmatmul.mubr.f32.gmra.mrb[0].mxu0 %v905
        %v1289 = vpop.f32.mrb[0].mxu0
        %v1290 = vadd.f32 %v976, %v1289
        %v1291 = vpop.f32.mrb[0].mxu0
        %v1292 = vadd.f32 %v976, %v1291
        %1293 = vmatprep.mubr.f32.mxu0 0.0
        %1294 = vmatmul.mubr.f32.gmra.mrb[0].mxu0 %v906
        %v1295 = vpop.f32.mrb[0].mxu0
        %v1296 = vadd.f32 %v981, %v1295
        %v1297 = vpop.f32.mrb[0].mxu0
        %v1298 = vadd.f32 %v981, %v1297
        %1299 = vmatprep.mubr.f32.mxu0 0.0
        %1300 = vmatmul.mubr.f32.gmra.mrb[0].mxu0 %v907
        %v1301 = vpop.f32.mrb[0].mxu0
        %v1302 = vadd.f32 %v986, %v1301
        %v1303 = vpop.f32.mrb[0].mxu0
        %v1304 = vadd.f32 %v986, %v1303
        %1305 = vmatprep.mubr.f32.mxu0 0.0
        %1306 = vmatmul.mubr.f32.gmra.mrb[0].mxu0 %v908
        %v1307 = vpop.f32.mrb[0].mxu0
        %v1308 = vadd.f32 %v991, %v1307
        %v1309 = vpop.f32.mrb[0].mxu0
        %v1310 = vadd.f32 %v991, %v1309
        %1311 = vmatprep.mubr.f32.mxu0 0.0
        %1312 = vmatmul.mubr.f32.gmra.mrb[0].mxu0 %v909
        %v1313 = vpop.f32.mrb[0].mxu0
        %v1314 = vadd.f32 %v996, %v1313
        %v1315 = vpop.f32.mrb[0].mxu0
        %v1316 = vadd.f32 %v996, %v1315
        %1317 = vmatprep.mubr.f32.mxu0 0.0
        %1318 = vmatmul.mubr.f32.gmra.mrb[0].mxu0 %v910
        %v1319 = vpop.f32.mrb[0].mxu0
        %v1320 = vadd.f32 %v1001, %v1319
        %v1321 = vpop.f32.mrb[0].mxu0
        %v1322 = vadd.f32 %v1001, %v1321
        %1323 = vmatprep.mubr.f32.mxu0 0.0
        %1324 = vmatmul.mubr.f32.gmra.mrb[0].mxu0 %v911
        %v1325 = vpop.f32.mrb[0].mxu0
        %v1326 = vadd.f32 %v1006, %v1325
        %v1327 = vpop.f32.mrb[0].mxu0
        %v1328 = vadd.f32 %v1006, %v1327
        %1329 = vdwg.mxu0
        %1330 = vmatprep.subr.mxu0 %v773
        %1331 = vmatpush1.msra.mxu0 %v772
        %1332 = vmatprep.subr.mxu0 %v781
        %1333 = vmatpush1.msra.mxu0 %v780
        %1334 = vmatprep.subr.mxu0 %v789
        %1335 = vmatpush1.msra.mxu0 %v788
        %1336 = vmatprep.subr.mxu0 %v797
        %1337 = vmatpush1.msra.mxu0 %v796
        %1338 = vmatprep.subr.mxu0 %v805
        %1339 = vmatpush1.msra.mxu0 %v804
        %1340 = vmatprep.subr.mxu0 %v813
        %1341 = vmatpush1.msra.mxu0 %v812
        %1342 = vmatprep.subr.mxu0 %v821
        %1343 = vmatpush1.msra.mxu0 %v820
        %1344 = vmatprep.subr.mxu0 %v829
        %1345 = vmatpush1.msra.mxu0 %v828
        %1346 = vmatprep.subr.mxu0 %v837
        %1347 = vmatpush1.msra.mxu0 %v836
        %1348 = vmatprep.subr.mxu0 %v845
        %1349 = vmatpush1.msra.mxu0 %v844
        %1350 = vmatprep.subr.mxu0 %v853
        %1351 = vmatpush1.msra.mxu0 %v852
        %1352 = vmatprep.subr.mxu0 %v861
        %1353 = vmatpush1.msra.mxu0 %v860
        %1354 = vmatprep.subr.mxu0 %v869
        %1355 = vmatpush1.msra.mxu0 %v868
        %1356 = vmatprep.subr.mxu0 %v877
        %1357 = vmatpush1.msra.mxu0 %v876
        %1358 = vmatprep.subr.mxu0 %v885
        %1359 = vmatpush1.msra.mxu0 %v884
        %1360 = vmatprep.subr.mxu0 %v893
        %1361 = vmatpush1.msra.mxu0 %v892
        %1362 = vmatprep.subr.mxu0 0.0
        %1363 = vmatpush1.msra.mxu0 0.0
        %1364 = vmatprep.subr.mxu0 0.0
        %1365 = vmatpush1.msra.mxu0 0.0
        %1366 = vmatprep.subr.mxu0 0.0
        %1367 = vmatpush1.msra.mxu0 0.0
        %1368 = vmatprep.subr.mxu0 0.0
        %1369 = vmatpush1.msra.mxu0 0.0
        %1370 = vmatprep.subr.mxu0 0.0
        %1371 = vmatpush1.msra.mxu0 0.0
        %1372 = vmatprep.subr.mxu0 0.0
        %1373 = vmatpush1.msra.mxu0 0.0
        %1374 = vmatprep.subr.mxu0 0.0
        %1375 = vmatpush1.msra.mxu0 0.0
        %1376 = vmatprep.subr.mxu0 0.0
        %1377 = vmatpush1.msra.mxu0 0.0
        %1378 = vmatprep.subr.mxu0 0.0
        %1379 = vmatpush1.msra.mxu0 0.0
        %1380 = vmatprep.subr.mxu0 0.0
        %1381 = vmatpush1.msra.mxu0 0.0
        %1382 = vmatprep.subr.mxu0 0.0
        %1383 = vmatpush1.msra.mxu0 0.0
        %1384 = vmatprep.subr.mxu0 0.0
        %1385 = vmatpush1.msra.mxu0 0.0
        %1386 = vmatprep.subr.mxu0 0.0
        %1387 = vmatpush1.msra.mxu0 0.0
        %1388 = vmatprep.subr.mxu0 0.0
        %1389 = vmatpush1.msra.mxu0 0.0
        %1390 = vmatprep.subr.mxu0 0.0
        %1391 = vmatpush1.msra.mxu0 0.0
        %1392 = vmatprep.subr.mxu0 0.0
        %1393 = vmatpush1.msra.mxu0 0.0
        %1394 = vmatprep.mubr.f32.mxu0 0.0
        %1395 = vmatmul.mubr.f32.gmra.mrb[0].mxu0 %v896
        %v1396 = vpop.f32.mrb[0].mxu0
        %v1397 = vadd.f32 %v931, %v1396
        %v1398 = vpop.f32.mrb[0].mxu0
        %v1399 = vadd.f32 %v931, %v1398
        %1400 = vmatprep.mubr.f32.mxu0 0.0
        %1401 = vmatmul.mubr.f32.gmra.mrb[0].mxu0 %v897
        %v1402 = vpop.f32.mrb[0].mxu0
        %v1403 = vadd.f32 %v936, %v1402
        %v1404 = vpop.f32.mrb[0].mxu0
        %v1405 = vadd.f32 %v936, %v1404
        %1406 = vmatprep.mubr.f32.mxu0 0.0
        %1407 = vmatmul.mubr.f32.gmra.mrb[0].mxu0 %v898
        %v1408 = vpop.f32.mrb[0].mxu0
        %v1409 = vadd.f32 %v941, %v1408
        %v1410 = vpop.f32.mrb[0].mxu0
        %v1411 = vadd.f32 %v941, %v1410
        %1412 = vmatprep.mubr.f32.mxu0 0.0
        %1413 = vmatmul.mubr.f32.gmra.mrb[0].mxu0 %v899
        %v1414 = vpop.f32.mrb[0].mxu0
        %v1415 = vadd.f32 %v946, %v1414
        %v1416 = vpop.f32.mrb[0].mxu0
        %v1417 = vadd.f32 %v946, %v1416
        %1418 = vmatprep.mubr.f32.mxu0 0.0
        %1419 = vmatmul.mubr.f32.gmra.mrb[0].mxu0 %v900
        %v1420 = vpop.f32.mrb[0].mxu0
        %v1421 = vadd.f32 %v951, %v1420
        %v1422 = vpop.f32.mrb[0].mxu0
        %v1423 = vadd.f32 %v951, %v1422
        %1424 = vmatprep.mubr.f32.mxu0 0.0
        %1425 = vmatmul.mubr.f32.gmra.mrb[0].mxu0 %v901
        %v1426 = vpop.f32.mrb[0].mxu0
        %v1427 = vadd.f32 %v956, %v1426
        %v1428 = vpop.f32.mrb[0].mxu0
        %v1429 = vadd.f32 %v956, %v1428
        %1430 = vmatprep.mubr.f32.mxu0 0.0
        %1431 = vmatmul.mubr.f32.gmra.mrb[0].mxu0 %v902
        %v1432 = vpop.f32.mrb[0].mxu0
        %v1433 = vadd.f32 %v961, %v1432
        %v1434 = vpop.f32.mrb[0].mxu0
        %v1435 = vadd.f32 %v961, %v1434
        %1436 = vmatprep.mubr.f32.mxu0 0.0
        %1437 = vmatmul.mubr.f32.gmra.mrb[0].mxu0 %v903
        %v1438 = vpop.f32.mrb[0].mxu0
        %v1439 = vadd.f32 %v966, %v1438
        %v1440 = vpop.f32.mrb[0].mxu0
        %v1441 = vadd.f32 %v966, %v1440
        %1442 = vmatprep.mubr.f32.mxu0 0.0
        %1443 = vmatmul.mubr.f32.gmra.mrb[0].mxu0 %v904
        %v1444 = vpop.f32.mrb[0].mxu0
        %v1445 = vadd.f32 %v971, %v1444
        %v1446 = vpop.f32.mrb[0].mxu0
        %v1447 = vadd.f32 %v971, %v1446
        %1448 = vmatprep.mubr.f32.mxu0 0.0
        %1449 = vmatmul.mubr.f32.gmra.mrb[0].mxu0 %v905
        %v1450 = vpop.f32.mrb[0].mxu0
        %v1451 = vadd.f32 %v976, %v1450
        %v1452 = vpop.f32.mrb[0].mxu0
        %v1453 = vadd.f32 %v976, %v1452
        %1454 = vmatprep.mubr.f32.mxu0 0.0
        %1455 = vmatmul.mubr.f32.gmra.mrb[0].mxu0 %v906
        %v1456 = vpop.f32.mrb[0].mxu0
        %v1457 = vadd.f32 %v981, %v1456
        %v1458 = vpop.f32.mrb[0].mxu0
        %v1459 = vadd.f32 %v981, %v1458
        %1460 = vmatprep.mubr.f32.mxu0 0.0
        %1461 = vmatmul.mubr.f32.gmra.mrb[0].mxu0 %v907
        %v1462 = vpop.f32.mrb[0].mxu0
        %v1463 = vadd.f32 %v986, %v1462
        %v1464 = vpop.f32.mrb[0].mxu0
        %v1465 = vadd.f32 %v986, %v1464
        %1466 = vmatprep.mubr.f32.mxu0 0.0
        %1467 = vmatmul.mubr.f32.gmra.mrb[0].mxu0 %v908
        %v1468 = vpop.f32.mrb[0].mxu0
        %v1469 = vadd.f32 %v991, %v1468
        %v1470 = vpop.f32.mrb[0].mxu0
        %v1471 = vadd.f32 %v991, %v1470
        %1472 = vmatprep.mubr.f32.mxu0 0.0
        %1473 = vmatmul.mubr.f32.gmra.mrb[0].mxu0 %v909
        %v1474 = vpop.f32.mrb[0].mxu0
        %v1475 = vadd.f32 %v996, %v1474
        %v1476 = vpop.f32.mrb[0].mxu0
        %v1477 = vadd.f32 %v996, %v1476
        %1478 = vmatprep.mubr.f32.mxu0 0.0
        %1479 = vmatmul.mubr.f32.gmra.mrb[0].mxu0 %v910
        %v1480 = vpop.f32.mrb[0].mxu0
        %v1481 = vadd.f32 %v1001, %v1480
        %v1482 = vpop.f32.mrb[0].mxu0
        %v1483 = vadd.f32 %v1001, %v1482
        %1484 = vmatprep.mubr.f32.mxu0 0.0
        %1485 = vmatmul.mubr.f32.gmra.mrb[0].mxu0 %v911
        %v1486 = vpop.f32.mrb[0].mxu0
        %v1487 = vadd.f32 %v1006, %v1486
        %v1488 = vpop.f32.mrb[0].mxu0
        %v1489 = vadd.f32 %v1006, %v1488
        %1490 = vdwg.mxu0
        %1491 = vmatprep.subr.mxu0 %v775
        %1492 = vmatpush1.msra.mxu0 %v774
        %1493 = vmatprep.subr.mxu0 %v783
        %1494 = vmatpush1.msra.mxu0 %v782
        %1495 = vmatprep.subr.mxu0 %v791
        %1496 = vmatpush1.msra.mxu0 %v790
        %1497 = vmatprep.subr.mxu0 %v799
        %1498 = vmatpush1.msra.mxu0 %v798
        %1499 = vmatprep.subr.mxu0 %v807
        %1500 = vmatpush1.msra.mxu0 %v806
        %1501 = vmatprep.subr.mxu0 %v815
        %1502 = vmatpush1.msra.mxu0 %v814
        %1503 = vmatprep.subr.mxu0 %v823
        %1504 = vmatpush1.msra.mxu0 %v822
        %1505 = vmatprep.subr.mxu0 %v831
        %1506 = vmatpush1.msra.mxu0 %v830
        %1507 = vmatprep.subr.mxu0 %v839
        %1508 = vmatpush1.msra.mxu0 %v838
        %1509 = vmatprep.subr.mxu0 %v847
        %1510 = vmatpush1.msra.mxu0 %v846
        %1511 = vmatprep.subr.mxu0 %v855
        %1512 = vmatpush1.msra.mxu0 %v854
        %1513 = vmatprep.subr.mxu0 %v863
        %1514 = vmatpush1.msra.mxu0 %v862
        %1515 = vmatprep.subr.mxu0 %v871
        %1516 = vmatpush1.msra.mxu0 %v870
        %1517 = vmatprep.subr.mxu0 %v879
        %1518 = vmatpush1.msra.mxu0 %v878
        %1519 = vmatprep.subr.mxu0 %v887
        %1520 = vmatpush1.msra.mxu0 %v886
        %1521 = vmatprep.subr.mxu0 %v895
        %1522 = vmatpush1.msra.mxu0 %v894
        %1523 = vmatprep.subr.mxu0 0.0
        %1524 = vmatpush1.msra.mxu0 0.0
        %1525 = vmatprep.subr.mxu0 0.0
        %1526 = vmatpush1.msra.mxu0 0.0
        %1527 = vmatprep.subr.mxu0 0.0
        %1528 = vmatpush1.msra.mxu0 0.0
        %1529 = vmatprep.subr.mxu0 0.0
        %1530 = vmatpush1.msra.mxu0 0.0
        %1531 = vmatprep.subr.mxu0 0.0
        %1532 = vmatpush1.msra.mxu0 0.0
        %1533 = vmatprep.subr.mxu0 0.0
        %1534 = vmatpush1.msra.mxu0 0.0
        %1535 = vmatprep.subr.mxu0 0.0
        %1536 = vmatpush1.msra.mxu0 0.0
        %1537 = vmatprep.subr.mxu0 0.0
        %1538 = vmatpush1.msra.mxu0 0.0
        %1539 = vmatprep.subr.mxu0 0.0
        %1540 = vmatpush1.msra.mxu0 0.0
        %1541 = vmatprep.subr.mxu0 0.0
        %1542 = vmatpush1.msra.mxu0 0.0
        %1543 = vmatprep.subr.mxu0 0.0
        %1544 = vmatpush1.msra.mxu0 0.0
        %1545 = vmatprep.subr.mxu0 0.0
        %1546 = vmatpush1.msra.mxu0 0.0
        %1547 = vmatprep.subr.mxu0 0.0
        %1548 = vmatpush1.msra.mxu0 0.0
        %1549 = vmatprep.subr.mxu0 0.0
        %1550 = vmatpush1.msra.mxu0 0.0
        %1551 = vmatprep.subr.mxu0 0.0
        %1552 = vmatpush1.msra.mxu0 0.0
        %1553 = vmatprep.subr.mxu0 0.0
        %1554 = vmatpush1.msra.mxu0 0.0
        %1555 = vmatprep.mubr.f32.mxu0 0.0
        %1556 = vmatmul.mubr.f32.gmra.mrb[0].mxu0 %v896
        %v1557 = vpop.f32.mrb[0].mxu0
        %v1558 = vadd.f32 %v931, %v1557
        %v1559 = vpop.f32.mrb[0].mxu0
        %v1560 = vadd.f32 %v931, %v1559
        %1561 = vmatprep.mubr.f32.mxu0 0.0
        %1562 = vmatmul.mubr.f32.gmra.mrb[0].mxu0 %v897
        %v1563 = vpop.f32.mrb[0].mxu0
        %v1564 = vadd.f32 %v936, %v1563
        %v1565 = vpop.f32.mrb[0].mxu0
        %v1566 = vadd.f32 %v936, %v1565
        %1567 = vmatprep.mubr.f32.mxu0 0.0
        %1568 = vmatmul.mubr.f32.gmra.mrb[0].mxu0 %v898
        %v1569 = vpop.f32.mrb[0].mxu0
        %v1570 = vadd.f32 %v941, %v1569
        %v1571 = vpop.f32.mrb[0].mxu0
        %v1572 = vadd.f32 %v941, %v1571
        %1573 = vmatprep.mubr.f32.mxu0 0.0
        %1574 = vmatmul.mubr.f32.gmra.mrb[0].mxu0 %v899
        %v1575 = vpop.f32.mrb[0].mxu0
        %v1576 = vadd.f32 %v946, %v1575
        %v1577 = vpop.f32.mrb[0].mxu0
        %v1578 = vadd.f32 %v946, %v1577
        %1579 = vmatprep.mubr.f32.mxu0 0.0
        %1580 = vmatmul.mubr.f32.gmra.mrb[0].mxu0 %v900
        %v1581 = vpop.f32.mrb[0].mxu0
        %v1582 = vadd.f32 %v951, %v1581
        %v1583 = vpop.f32.mrb[0].mxu0
        %v1584 = vadd.f32 %v951, %v1583
        %1585 = vmatprep.mubr.f32.mxu0 0.0
        %1586 = vmatmul.mubr.f32.gmra.mrb[0].mxu0 %v901
        %v1587 = vpop.f32.mrb[0].mxu0
        %v1588 = vadd.f32 %v956, %v1587
        %v1589 = vpop.f32.mrb[0].mxu0
        %v1590 = vadd.f32 %v956, %v1589
        %1591 = vmatprep.mubr.f32.mxu0 0.0
        %1592 = vmatmul.mubr.f32.gmra.mrb[0].mxu0 %v902
        %v1593 = vpop.f32.mrb[0].mxu0
        %v1594 = vadd.f32 %v961, %v1593
        %v1595 = vpop.f32.mrb[0].mxu0
        %v1596 = vadd.f32 %v961, %v1595
        %1597 = vmatprep.mubr.f32.mxu0 0.0
        %1598 = vmatmul.mubr.f32.gmra.mrb[0].mxu0 %v903
        %v1599 = vpop.f32.mrb[0].mxu0
        %v1600 = vadd.f32 %v966, %v1599
        %v1601 = vpop.f32.mrb[0].mxu0
        %v1602 = vadd.f32 %v966, %v1601
        %1603 = vmatprep.mubr.f32.mxu0 0.0
        %1604 = vmatmul.mubr.f32.gmra.mrb[0].mxu0 %v904
        %v1605 = vpop.f32.mrb[0].mxu0
        %v1606 = vadd.f32 %v971, %v1605
        %v1607 = vpop.f32.mrb[0].mxu0
        %v1608 = vadd.f32 %v971, %v1607
        %1609 = vmatprep.mubr.f32.mxu0 0.0
        %1610 = vmatmul.mubr.f32.gmra.mrb[0].mxu0 %v905
        %v1611 = vpop.f32.mrb[0].mxu0
        %v1612 = vadd.f32 %v976, %v1611
        %v1613 = vpop.f32.mrb[0].mxu0
        %v1614 = vadd.f32 %v976, %v1613
        %1615 = vmatprep.mubr.f32.mxu0 0.0
        %1616 = vmatmul.mubr.f32.gmra.mrb[0].mxu0 %v906
        %v1617 = vpop.f32.mrb[0].mxu0
        %v1618 = vadd.f32 %v981, %v1617
        %v1619 = vpop.f32.mrb[0].mxu0
        %v1620 = vadd.f32 %v981, %v1619
        %1621 = vmatprep.mubr.f32.mxu0 0.0
        %1622 = vmatmul.mubr.f32.gmra.mrb[0].mxu0 %v907
        %v1623 = vpop.f32.mrb[0].mxu0
        %v1624 = vadd.f32 %v986, %v1623
        %v1625 = vpop.f32.mrb[0].mxu0
        %v1626 = vadd.f32 %v986, %v1625
        %1627 = vmatprep.mubr.f32.mxu0 0.0
        %1628 = vmatmul.mubr.f32.gmra.mrb[0].mxu0 %v908
        %v1629 = vpop.f32.mrb[0].mxu0
        %v1630 = vadd.f32 %v991, %v1629
        %v1631 = vpop.f32.mrb[0].mxu0
        %v1632 = vadd.f32 %v991, %v1631
        %1633 = vmatprep.mubr.f32.mxu0 0.0
        %1634 = vmatmul.mubr.f32.gmra.mrb[0].mxu0 %v909
        %v1635 = vpop.f32.mrb[0].mxu0
        %v1636 = vadd.f32 %v996, %v1635
        %v1637 = vpop.f32.mrb[0].mxu0
        %v1638 = vadd.f32 %v996, %v1637
        %1639 = vmatprep.mubr.f32.mxu0 0.0
        %1640 = vmatmul.mubr.f32.gmra.mrb[0].mxu0 %v910
        %v1641 = vpop.f32.mrb[0].mxu0
        %v1642 = vadd.f32 %v1001, %v1641
        %v1643 = vpop.f32.mrb[0].mxu0
        %v1644 = vadd.f32 %v1001, %v1643
        %1645 = vmatprep.mubr.f32.mxu0 0.0
        %1646 = vmatmul.mubr.f32.gmra.mrb[0].mxu0 %v911
        %v1647 = vpop.f32.mrb[0].mxu0
        %v1648 = vadd.f32 %v1006, %v1647
        %v1649 = vpop.f32.mrb[0].mxu0
        %v1650 = vadd.f32 %v1006, %v1649
        %1651 = vdwg.mxu0
        %v1652 = vtanh.pop %v1075
        %v1653 = vtanh.pop %v1077
        %v1654 = vtanh.pop %v1236
        %v1655 = vtanh.pop %v1238
        %v1656 = vtanh.pop %v1397
        %v1657 = vtanh.pop %v1399
        %v1658 = vtanh.pop %v1558
        %v1659 = vtanh.pop %v1560
        %v1660 = vtanh.pop %v1081
        %v1661 = vtanh.pop %v1083
        %v1662 = vtanh.pop %v1242
        %v1663 = vtanh.pop %v1244
        %v1664 = vtanh.pop %v1403
        %v1665 = vtanh.pop %v1405
        %v1666 = vtanh.pop %v1564
        %v1667 = vtanh.pop %v1566
        %v1668 = vtanh.pop %v1087
        %v1669 = vtanh.pop %v1089
        %v1670 = vtanh.pop %v1248
        %v1671 = vtanh.pop %v1250
        %v1672 = vtanh.pop %v1409
        %v1673 = vtanh.pop %v1411
        %v1674 = vtanh.pop %v1570
        %v1675 = vtanh.pop %v1572
        %v1676 = vtanh.pop %v1093
        %v1677 = vtanh.pop %v1095
        %v1678 = vtanh.pop %v1254
        %v1679 = vtanh.pop %v1256
        %v1680 = vtanh.pop %v1415
        %v1681 = vtanh.pop %v1417
        %v1682 = vtanh.pop %v1576
        %v1683 = vtanh.pop %v1578
        %v1684 = vtanh.pop %v1099
        %v1685 = vtanh.pop %v1101
        %v1686 = vtanh.pop %v1260
        %v1687 = vtanh.pop %v1262
        %v1688 = vtanh.pop %v1421
        %v1689 = vtanh.pop %v1423
        %v1690 = vtanh.pop %v1582
        %v1691 = vtanh.pop %v1584
        %v1692 = vtanh.pop %v1105
        %v1693 = vtanh.pop %v1107
        %v1694 = vtanh.pop %v1266
        %v1695 = vtanh.pop %v1268
        %v1696 = vtanh.pop %v1427
        %v1697 = vtanh.pop %v1429
        %v1698 = vtanh.pop %v1588
        %v1699 = vtanh.pop %v1590
        %v1700 = vtanh.pop %v1111
        %v1701 = vtanh.pop %v1113
        %v1702 = vtanh.pop %v1272
        %v1703 = vtanh.pop %v1274
        %v1704 = vtanh.pop %v1433
        %v1705 = vtanh.pop %v1435
        %v1706 = vtanh.pop %v1594
        %v1707 = vtanh.pop %v1596
        %v1708 = vtanh.pop %v1117
        %v1709 = vtanh.pop %v1119
        %v1710 = vtanh.pop %v1278
        %v1711 = vtanh.pop %v1280
        %v1712 = vtanh.pop %v1439
        %v1713 = vtanh.pop %v1441
        %v1714 = vtanh.pop %v1600
        %v1715 = vtanh.pop %v1602
        %v1716 = vtanh.pop %v1123
        %v1717 = vtanh.pop %v1125
        %v1718 = vtanh.pop %v1284
        %v1719 = vtanh.pop %v1286
        %v1720 = vtanh.pop %v1445
        %v1721 = vtanh.pop %v1447
        %v1722 = vtanh.pop %v1606
        %v1723 = vtanh.pop %v1608
        %v1724 = vtanh.pop %v1129
        %v1725 = vtanh.pop %v1131
        %v1726 = vtanh.pop %v1290
        %v1727 = vtanh.pop %v1292
        %v1728 = vtanh.pop %v1451
        %v1729 = vtanh.pop %v1453
        %v1730 = vtanh.pop %v1612
        %v1731 = vtanh.pop %v1614
        %v1732 = vtanh.pop %v1135
        %v1733 = vtanh.pop %v1137
        %v1734 = vtanh.pop %v1296
        %v1735 = vtanh.pop %v1298
        %v1736 = vtanh.pop %v1457
        %v1737 = vtanh.pop %v1459
        %v1738 = vtanh.pop %v1618
        %v1739 = vtanh.pop %v1620
        %v1740 = vtanh.pop %v1141
        %v1741 = vtanh.pop %v1143
        %v1742 = vtanh.pop %v1302
        %v1743 = vtanh.pop %v1304
        %v1744 = vtanh.pop %v1463
        %v1745 = vtanh.pop %v1465
        %v1746 = vtanh.pop %v1624
        %v1747 = vtanh.pop %v1626
        %v1748 = vtanh.pop %v1147
        %v1749 = vtanh.pop %v1149
        %v1750 = vtanh.pop %v1308
        %v1751 = vtanh.pop %v1310
        %v1752 = vtanh.pop %v1469
        %v1753 = vtanh.pop %v1471
        %v1754 = vtanh.pop %v1630
        %v1755 = vtanh.pop %v1632
        %v1756 = vtanh.pop %v1153
        %v1757 = vtanh.pop %v1155
        %v1758 = vtanh.pop %v1314
        %v1759 = vtanh.pop %v1316
        %v1760 = vtanh.pop %v1475
        %v1761 = vtanh.pop %v1477
        %v1762 = vtanh.pop %v1636
        %v1763 = vtanh.pop %v1638
        %v1764 = vtanh.pop %v1159
        %v1765 = vtanh.pop %v1161
        %v1766 = vtanh.pop %v1320
        %v1767 = vtanh.pop %v1322
        %v1768 = vtanh.pop %v1481
        %v1769 = vtanh.pop %v1483
        %v1770 = vtanh.pop %v1642
        %v1771 = vtanh.pop %v1644
        %v1772 = vtanh.pop %v1165
        %v1773 = vtanh.pop %v1167
        %v1774 = vtanh.pop %v1326
        %v1775 = vtanh.pop %v1328
        %v1776 = vtanh.pop %v1487
        %v1777 = vtanh.pop %v1489
        %v1778 = vtanh.pop %v1648
        %v1779 = vtanh.pop %v1650
        %v1780 = vld [vmem:[%s5] sm:$0x1]
        %s1781 = sld [smem:[#allocation2]]
        %v1782 = vstv %s1781
        %1783 = vmatprep.subr.mxu0 %v1653
        %1784 = vmatpush1.msra.mxu0 %v1652
        %1785 = vmatprep.subr.mxu0 %v1661
        %1786 = vmatpush1.msra.mxu0 %v1660
        %1787 = vmatprep.subr.mxu0 %v1669
        %1788 = vmatpush1.msra.mxu0 %v1668
        %1789 = vmatprep.subr.mxu0 %v1677
        %1790 = vmatpush1.msra.mxu0 %v1676
        %1791 = vmatprep.subr.mxu0 %v1685
        %1792 = vmatpush1.msra.mxu0 %v1684
        %1793 = vmatprep.subr.mxu0 %v1693
        %1794 = vmatpush1.msra.mxu0 %v1692
        %1795 = vmatprep.subr.mxu0 %v1701
        %1796 = vmatpush1.msra.mxu0 %v1700
        %1797 = vmatprep.subr.mxu0 %v1709
        %1798 = vmatpush1.msra.mxu0 %v1708
        %1799 = vmatprep.subr.mxu0 %v1717
        %1800 = vmatpush1.msra.mxu0 %v1716
        %1801 = vmatprep.subr.mxu0 %v1725
        %1802 = vmatpush1.msra.mxu0 %v1724
        %1803 = vmatprep.subr.mxu0 %v1733
        %1804 = vmatpush1.msra.mxu0 %v1732
        %1805 = vmatprep.subr.mxu0 %v1741
        %1806 = vmatpush1.msra.mxu0 %v1740
        %1807 = vmatprep.subr.mxu0 %v1749
        %1808 = vmatpush1.msra.mxu0 %v1748
        %1809 = vmatprep.subr.mxu0 %v1757
        %1810 = vmatpush1.msra.mxu0 %v1756
        %1811 = vmatprep.subr.mxu0 %v1765
        %1812 = vmatpush1.msra.mxu0 %v1764
        %1813 = vmatprep.subr.mxu0 %v1773
        %1814 = vmatpush1.msra.mxu0 %v1772
        %1815 = vmatprep.subr.mxu0 0.0
        %1816 = vmatpush1.msra.mxu0 0.0
        %1817 = vmatprep.subr.mxu0 0.0
        %1818 = vmatpush1.msra.mxu0 0.0
        %1819 = vmatprep.subr.mxu0 0.0
        %1820 = vmatpush1.msra.mxu0 0.0
        %1821 = vmatprep.subr.mxu0 0.0
        %1822 = vmatpush1.msra.mxu0 0.0
        %1823 = vmatprep.subr.mxu0 0.0
        %1824 = vmatpush1.msra.mxu0 0.0
        %1825 = vmatprep.subr.mxu0 0.0
        %1826 = vmatpush1.msra.mxu0 0.0
        %1827 = vmatprep.subr.mxu0 0.0
        %1828 = vmatpush1.msra.mxu0 0.0
        %1829 = vmatprep.subr.mxu0 0.0
        %1830 = vmatpush1.msra.mxu0 0.0
        %1831 = vmatprep.subr.mxu0 0.0
        %1832 = vmatpush1.msra.mxu0 0.0
        %1833 = vmatprep.subr.mxu0 0.0
        %1834 = vmatpush1.msra.mxu0 0.0
        %1835 = vmatprep.subr.mxu0 0.0
        %1836 = vmatpush1.msra.mxu0 0.0
        %1837 = vmatprep.subr.mxu0 0.0
        %1838 = vmatpush1.msra.mxu0 0.0
        %1839 = vmatprep.subr.mxu0 0.0
        %1840 = vmatpush1.msra.mxu0 0.0
        %1841 = vmatprep.subr.mxu0 0.0
        %1842 = vmatpush1.msra.mxu0 0.0
        %1843 = vmatprep.subr.mxu0 0.0
        %1844 = vmatpush1.msra.mxu0 0.0
        %1845 = vmatprep.subr.mxu0 0.0
        %1846 = vmatpush1.msra.mxu0 0.0
        %1847 = vmatprep.mubr.f32.mxu0 0.0
        %1848 = vmatmul.mubr.f32.gmra.mrb[0].mxu0 %v1780
        %v1849 = vpop.f32.mrb[0].mxu0
        %v1850 = vadd.f32 %v1782, %v1849
        %v1851 = vpop.f32.mrb[0].mxu0
        %v1852 = vadd.f32 %v1782, %v1851
        %1853 = vdwg.mxu0
        %1854 = vmatprep.subr.mxu0 %v1655
        %1855 = vmatpush1.msra.mxu0 %v1654
        %1856 = vmatprep.subr.mxu0 %v1663
        %1857 = vmatpush1.msra.mxu0 %v1662
        %1858 = vmatprep.subr.mxu0 %v1671
        %1859 = vmatpush1.msra.mxu0 %v1670
        %1860 = vmatprep.subr.mxu0 %v1679
        %1861 = vmatpush1.msra.mxu0 %v1678
        %1862 = vmatprep.subr.mxu0 %v1687
        %1863 = vmatpush1.msra.mxu0 %v1686
        %1864 = vmatprep.subr.mxu0 %v1695
        %1865 = vmatpush1.msra.mxu0 %v1694
        %1866 = vmatprep.subr.mxu0 %v1703
        %1867 = vmatpush1.msra.mxu0 %v1702
        %1868 = vmatprep.subr.mxu0 %v1711
        %1869 = vmatpush1.msra.mxu0 %v1710
        %1870 = vmatprep.subr.mxu0 %v1719
        %1871 = vmatpush1.msra.mxu0 %v1718
        %1872 = vmatprep.subr.mxu0 %v1727
        %1873 = vmatpush1.msra.mxu0 %v1726
        %1874 = vmatprep.subr.mxu0 %v1735
        %1875 = vmatpush1.msra.mxu0 %v1734
        %1876 = vmatprep.subr.mxu0 %v1743
        %1877 = vmatpush1.msra.mxu0 %v1742
        %1878 = vmatprep.subr.mxu0 %v1751
        %1879 = vmatpush1.msra.mxu0 %v1750
        %1880 = vmatprep.subr.mxu0 %v1759
        %1881 = vmatpush1.msra.mxu0 %v1758
        %1882 = vmatprep.subr.mxu0 %v1767
        %1883 = vmatpush1.msra.mxu0 %v1766
        %1884 = vmatprep.subr.mxu0 %v1775
        %1885 = vmatpush1.msra.mxu0 %v1774
        %1886 = vmatprep.subr.mxu0 0.0
        %1887 = vmatpush1.msra.mxu0 0.0
        %1888 = vmatprep.subr.mxu0 0.0
        %1889 = vmatpush1.msra.mxu0 0.0
        %1890 = vmatprep.subr.mxu0 0.0
        %1891 = vmatpush1.msra.mxu0 0.0
        %1892 = vmatprep.subr.mxu0 0.0
        %1893 = vmatpush1.msra.mxu0 0.0
        %1894 = vmatprep.subr.mxu0 0.0
        %1895 = vmatpush1.msra.mxu0 0.0
        %1896 = vmatprep.subr.mxu0 0.0
        %1897 = vmatpush1.msra.mxu0 0.0
        %1898 = vmatprep.subr.mxu0 0.0
        %1899 = vmatpush1.msra.mxu0 0.0
        %1900 = vmatprep.subr.mxu0 0.0
        %1901 = vmatpush1.msra.mxu0 0.0
        %1902 = vmatprep.subr.mxu0 0.0
        %1903 = vmatpush1.msra.mxu0 0.0
        %1904 = vmatprep.subr.mxu0 0.0
        %1905 = vmatpush1.msra.mxu0 0.0
        %1906 = vmatprep.subr.mxu0 0.0
        %1907 = vmatpush1.msra.mxu0 0.0
        %1908 = vmatprep.subr.mxu0 0.0
        %1909 = vmatpush1.msra.mxu0 0.0
        %1910 = vmatprep.subr.mxu0 0.0
        %1911 = vmatpush1.msra.mxu0 0.0
        %1912 = vmatprep.subr.mxu0 0.0
        %1913 = vmatpush1.msra.mxu0 0.0
        %1914 = vmatprep.subr.mxu0 0.0
        %1915 = vmatpush1.msra.mxu0 0.0
        %1916 = vmatprep.subr.mxu0 0.0
        %1917 = vmatpush1.msra.mxu0 0.0
        %1918 = vmatprep.mubr.f32.mxu0 0.0
        %1919 = vmatmul.mubr.f32.gmra.mrb[0].mxu0 %v1780
        %v1920 = vpop.f32.mrb[0].mxu0
        %v1921 = vadd.f32 %v1782, %v1920
        %v1922 = vpop.f32.mrb[0].mxu0
        %v1923 = vadd.f32 %v1782, %v1922
        %1924 = vdwg.mxu0
        %1925 = vmatprep.subr.mxu0 %v1657
        %1926 = vmatpush1.msra.mxu0 %v1656
        %1927 = vmatprep.subr.mxu0 %v1665
        %1928 = vmatpush1.msra.mxu0 %v1664
        %1929 = vmatprep.subr.mxu0 %v1673
        %1930 = vmatpush1.msra.mxu0 %v1672
        %1931 = vmatprep.subr.mxu0 %v1681
        %1932 = vmatpush1.msra.mxu0 %v1680
        %1933 = vmatprep.subr.mxu0 %v1689
        %1934 = vmatpush1.msra.mxu0 %v1688
        %1935 = vmatprep.subr.mxu0 %v1697
        %1936 = vmatpush1.msra.mxu0 %v1696
        %1937 = vmatprep.subr.mxu0 %v1705
        %1938 = vmatpush1.msra.mxu0 %v1704
        %1939 = vmatprep.subr.mxu0 %v1713
        %1940 = vmatpush1.msra.mxu0 %v1712
        %1941 = vmatprep.subr.mxu0 %v1721
        %1942 = vmatpush1.msra.mxu0 %v1720
        %1943 = vmatprep.subr.mxu0 %v1729
        %1944 = vmatpush1.msra.mxu0 %v1728
        %1945 = vmatprep.subr.mxu0 %v1737
        %1946 = vmatpush1.msra.mxu0 %v1736
        %1947 = vmatprep.subr.mxu0 %v1745
        %1948 = vmatpush1.msra.mxu0 %v1744
        %1949 = vmatprep.subr.mxu0 %v1753
        %1950 = vmatpush1.msra.mxu0 %v1752
        %1951 = vmatprep.subr.mxu0 %v1761
        %1952 = vmatpush1.msra.mxu0 %v1760
        %1953 = vmatprep.subr.mxu0 %v1769
        %1954 = vmatpush1.msra.mxu0 %v1768
        %1955 = vmatprep.subr.mxu0 %v1777
        %1956 = vmatpush1.msra.mxu0 %v1776
        %1957 = vmatprep.subr.mxu0 0.0
        %1958 = vmatpush1.msra.mxu0 0.0
        %1959 = vmatprep.subr.mxu0 0.0
        %1960 = vmatpush1.msra.mxu0 0.0
        %1961 = vmatprep.subr.mxu0 0.0
        %1962 = vmatpush1.msra.mxu0 0.0
        %1963 = vmatprep.subr.mxu0 0.0
        %1964 = vmatpush1.msra.mxu0 0.0
        %1965 = vmatprep.subr.mxu0 0.0
        %1966 = vmatpush1.msra.mxu0 0.0
        %1967 = vmatprep.subr.mxu0 0.0
        %1968 = vmatpush1.msra.mxu0 0.0
        %1969 = vmatprep.subr.mxu0 0.0
        %1970 = vmatpush1.msra.mxu0 0.0
        %1971 = vmatprep.subr.mxu0 0.0
        %1972 = vmatpush1.msra.mxu0 0.0
        %1973 = vmatprep.subr.mxu0 0.0
        %1974 = vmatpush1.msra.mxu0 0.0
        %1975 = vmatprep.subr.mxu0 0.0
        %1976 = vmatpush1.msra.mxu0 0.0
        %1977 = vmatprep.subr.mxu0 0.0
        %1978 = vmatpush1.msra.mxu0 0.0
        %1979 = vmatprep.subr.mxu0 0.0
        %1980 = vmatpush1.msra.mxu0 0.0
        %1981 = vmatprep.subr.mxu0 0.0
        %1982 = vmatpush1.msra.mxu0 0.0
        %1983 = vmatprep.subr.mxu0 0.0
        %1984 = vmatpush1.msra.mxu0 0.0
        %1985 = vmatprep.subr.mxu0 0.0
        %1986 = vmatpush1.msra.mxu0 0.0
        %1987 = vmatprep.subr.mxu0 0.0
        %1988 = vmatpush1.msra.mxu0 0.0
        %1989 = vmatprep.mubr.f32.mxu0 0.0
        %1990 = vmatmul.mubr.f32.gmra.mrb[0].mxu0 %v1780
        %v1991 = vpop.f32.mrb[0].mxu0
        %v1992 = vadd.f32 %v1782, %v1991
        %v1993 = vpop.f32.mrb[0].mxu0
        %v1994 = vadd.f32 %v1782, %v1993
        %1995 = vdwg.mxu0
        %1996 = vmatprep.subr.mxu0 %v1659
        %1997 = vmatpush1.msra.mxu0 %v1658
        %1998 = vmatprep.subr.mxu0 %v1667
        %1999 = vmatpush1.msra.mxu0 %v1666
        %2000 = vmatprep.subr.mxu0 %v1675
        %2001 = vmatpush1.msra.mxu0 %v1674
        %2002 = vmatprep.subr.mxu0 %v1683
        %2003 = vmatpush1.msra.mxu0 %v1682
        %2004 = vmatprep.subr.mxu0 %v1691
        %2005 = vmatpush1.msra.mxu0 %v1690
        %2006 = vmatprep.subr.mxu0 %v1699
        %2007 = vmatpush1.msra.mxu0 %v1698
        %2008 = vmatprep.subr.mxu0 %v1707
        %2009 = vmatpush1.msra.mxu0 %v1706
        %2010 = vmatprep.subr.mxu0 %v1715
        %2011 = vmatpush1.msra.mxu0 %v1714
        %2012 = vmatprep.subr.mxu0 %v1723
        %2013 = vmatpush1.msra.mxu0 %v1722
        %2014 = vmatprep.subr.mxu0 %v1731
        %2015 = vmatpush1.msra.mxu0 %v1730
        %2016 = vmatprep.subr.mxu0 %v1739
        %2017 = vmatpush1.msra.mxu0 %v1738
        %2018 = vmatprep.subr.mxu0 %v1747
        %2019 = vmatpush1.msra.mxu0 %v1746
        %2020 = vmatprep.subr.mxu0 %v1755
        %2021 = vmatpush1.msra.mxu0 %v1754
        %2022 = vmatprep.subr.mxu0 %v1763
        %2023 = vmatpush1.msra.mxu0 %v1762
        %2024 = vmatprep.subr.mxu0 %v1771
        %2025 = vmatpush1.msra.mxu0 %v1770
        %2026 = vmatprep.subr.mxu0 %v1779
        %2027 = vmatpush1.msra.mxu0 %v1778
        %2028 = vmatprep.subr.mxu0 0.0
        %2029 = vmatpush1.msra.mxu0 0.0
        %2030 = vmatprep.subr.mxu0 0.0
        %2031 = vmatpush1.msra.mxu0 0.0
        %2032 = vmatprep.subr.mxu0 0.0
        %2033 = vmatpush1.msra.mxu0 0.0
        %2034 = vmatprep.subr.mxu0 0.0
        %2035 = vmatpush1.msra.mxu0 0.0
        %2036 = vmatprep.subr.mxu0 0.0
        %2037 = vmatpush1.msra.mxu0 0.0
        %2038 = vmatprep.subr.mxu0 0.0
        %2039 = vmatpush1.msra.mxu0 0.0
        %2040 = vmatprep.subr.mxu0 0.0
        %2041 = vmatpush1.msra.mxu0 0.0
        %2042 = vmatprep.subr.mxu0 0.0
        %2043 = vmatpush1.msra.mxu0 0.0
        %2044 = vmatprep.subr.mxu0 0.0
        %2045 = vmatpush1.msra.mxu0 0.0
        %2046 = vmatprep.subr.mxu0 0.0
        %2047 = vmatpush1.msra.mxu0 0.0
        %2048 = vmatprep.subr.mxu0 0.0
        %2049 = vmatpush1.msra.mxu0 0.0
        %2050 = vmatprep.subr.mxu0 0.0
        %2051 = vmatpush1.msra.mxu0 0.0
        %2052 = vmatprep.subr.mxu0 0.0
        %2053 = vmatpush1.msra.mxu0 0.0
        %2054 = vmatprep.subr.mxu0 0.0
        %2055 = vmatpush1.msra.mxu0 0.0
        %2056 = vmatprep.subr.mxu0 0.0
        %2057 = vmatpush1.msra.mxu0 0.0
        %2058 = vmatprep.subr.mxu0 0.0
        %2059 = vmatpush1.msra.mxu0 0.0
        %2060 = vmatprep.mubr.f32.mxu0 0.0
        %2061 = vmatmul.mubr.f32.gmra.mrb[0].mxu0 %v1780
        %v2062 = vpop.f32.mrb[0].mxu0
        %v2063 = vadd.f32 %v1782, %v2062
        %v2064 = vpop.f32.mrb[0].mxu0
        %v2065 = vadd.f32 %v1782, %v2064
        %2066 = vdwg.mxu0
        %v2075 = vcombine.low %v1850, %v1852
        %v2076 = vcombine.low %v1921, %v1923
        %v2077 = vcombine.low %v1992, %v1994
        %v2078 = vcombine.low %v2063, %v2065
        %v2080 = vunpack.c.l.s4 1966171168
        %v2081 = vunpack.c.0.s8 %v2080
        %v2082 = vlaneseq
        %v2083 = vshrl.u32 %v2082, 7
        %v2084 = vsub.s32 %v2081, %v2083
        %v2085 = vrot.slane %v2075, %v2084
        %v2087 = vunpack.c.l.s4 1966171168
        %v2088 = vunpack.c.0.s8 %v2087
        %v2089 = vlaneseq
        %v2090 = vshrl.u32 %v2089, 7
        %v2091 = vsub.s32 %v2088, %v2090
        %v2092 = vrot.slane %v2076, %v2091
        %v2094 = vunpack.c.l.s4 1966171168
        %v2095 = vunpack.c.0.s8 %v2094
        %v2096 = vlaneseq
        %v2097 = vshrl.u32 %v2096, 7
        %v2098 = vsub.s32 %v2095, %v2097
        %v2099 = vrot.slane %v2077, %v2098
        %v2101 = vunpack.c.l.s4 1966171168
        %v2102 = vunpack.c.0.s8 %v2101
        %v2103 = vlaneseq
        %v2104 = vshrl.u32 %v2103, 7
        %v2105 = vsub.s32 %v2102, %v2104
        %v2106 = vrot.slane %v2078, %v2105
        %v2107 = vcombine.low %v2085, %v2092
        %v2108 = vcombine.low %v2099, %v2106
        %v2110 = vunpack.c.l.s4 1966171168
        %v2111 = vunpack.c.0.s8 %v2110
        %v2112 = vlaneseq
        %v2113 = vshrl.u32 %v2112, 7
        %v2114 = vsub.s32 %v2111, %v2113
        %v2115 = vrot.slane %v2107, %v2114
        %v2117 = vunpack.c.l.s4 1966171168
        %v2118 = vunpack.c.0.s8 %v2117
        %v2119 = vlaneseq
        %v2120 = vshrl.u32 %v2119, 7
        %v2121 = vsub.s32 %v2118, %v2120
        %v2122 = vrot.slane %v2108, %v2121
        %v2123 = vcombine.low %v2115, %v2122
        %2125 = vst [vmem:[%s271] sm:$0xff] %v2123
        %s2126 = sand.u32 %s182, 1
        %s2127 = scalar_lea.sflag [#allocation4], %s2126
        %s2128 = sand.u32 %s182, 1
        %s2129 = smul.addr %s2128, 8
        %s2130 = scalar_lea.vmem [#allocation3], %s2129
        // Predicated region
        $region49: #{net_forward.1} parent=47 // pred_check
          %p2131 = pneg %p192
        $region50: #{net_forward.1} parent=47 // pred_check_branch
          %2133 = sbr.rel (%p2131) target = $region52
        $region51: #{net_forward.1} parent=47 // pred_region
          %s2134 = smul.u32 8, %s22
          %s2136 = ssub.s32 128, 128
          %2137 = vsyncadd %s2127, %s2136
          %s2138 = smul.addr %s2134, 16
          %s2139 = scalar_lea.hbm %s7, %s2138
          %s2141 = sshll.u32 %s2130, 4
          %s2142 = int_to_ptr.vmem [resolvable:$true] %s2141
          %2144 = dma.vmem_to_hbm [thread:$0]  %s2142, 128, %s2139, %s2127
        $region52: #{net_forward.1} parent=47 // pred_fallthru
          _
      $region48: #{net_forward.1} parent=5 // pred_fallthru
        _
      %p2145 = scmp.le.s32.totalorder 2, %s17
      // Predicated region
      $region53: #{net_forward.1} parent=5 // pred_check
        %p2146 = pneg %p2145
      $region54: #{net_forward.1} parent=5 // pred_check_branch
        %2148 = sbr.rel (%p2146) target = $region56
      $region55: #{net_forward.1} parent=5 // pred_region
        %s2149 = ssub.s32 %s17, 2
        // Predicated region
        $region57: #{net_forward.1} parent=55 // pred_check
          %p2150 = pneg %p198
        $region58: #{net_forward.1} parent=55 // pred_check_branch
          %2152 = sbr.rel (%p2150) target = $region60
        $region59: #{net_forward.1} parent=55 // pred_region
          %s2153 = sand.u32 %s183, 1
          %s2154 = scalar_lea.sflag [#allocation4], %s2153
          %s2155 = sand.u32 %s183, 1
          %s2156 = smul.addr %s2155, 8
          %s2157 = scalar_lea.vmem [#allocation3], %s2156
          %2158 = dma.done %s2154, 128
        $region60: #{net_forward.1} parent=55 // pred_fallthru
          _
      $region56: #{net_forward.1} parent=5 // pred_fallthru
        _
    $region6: #{net_forward.1} parent=1 // loop_footer
      %s21 = sadd.s32 1, %s17
    $region7: #{net_forward.1} parent=1 // loop_footer_branch
      %16 = sbr.rel target = $region3
    $region8: #{net_forward.1} parent=1 // loop_exit
      _
    %2159 = vsyncpa [#allocation4], 1
    %s2160 = scalar_lea.sflag [#allocation4], 1
    %2161 = vsyncpa %s2160, 1

</llo_original>
